<compile_context>
chip_gen: v7x
topology: tpu7x:2x2x1
jax: 0.10.0
libtpu: 0.0.40
codegen_flags: <defaults>
</compile_context>

<pallas_src>
import functools
import math

import jax
import jax.numpy as jnp
from jax.experimental import pallas as pl
from jax.experimental.pallas import tpu as pltpu


# ----------------------------------------------------------------------------
# Kernel: full cross-attention block for the whole (batch-folded) problem.
# ----------------------------------------------------------------------------
def _cross_attn_kernel(xq_ref, xkv_ref,
                       wq_ref, wk_ref, wv_ref, wo_ref, w1_ref, w2_ref,
                       vec_ref, bf1_ref,
                       out_ref,
                       *, num_heads, head_dim, batch, eps):
    f32 = jnp.float32
    bf16 = jnp.bfloat16
    H, Dh = num_heads, head_dim

    # Flattened activations, rows ordered (seq, batch).  bf16 on the wire,
    # f32 for all elementwise / residual / LayerNorm math.
    xq_bf = xq_ref[...]                       # (Nq, Epc) bf16
    xkv_bf = xkv_ref[...]                     # (Nk, Esq) bf16
    xq = xq_bf.astype(f32)                    # residual path in f32
    Nq = xq_bf.shape[0]
    Nk = xkv_bf.shape[0]

    # Packed per-channel vectors (one DMA):
    #   0:bq(scaled) 1:bk 2:bv 3:bo 4:ln1_g 5:ln1_b 6:ff2_b 7:ln2_g 8:ln2_b
    bq = vec_ref[0:1, :]
    bk = vec_ref[1:2, :]
    bv = vec_ref[2:3, :]
    bo = vec_ref[3:4, :]
    g1 = vec_ref[4:5, :]
    be1 = vec_ref[5:6, :]
    bf2 = vec_ref[6:7, :]
    g2 = vec_ref[7:8, :]
    be2 = vec_ref[8:9, :]
    bf1 = bf1_ref[...]                        # (1, Eff)

    # --- Q/K/V projections: bf16 MXU inputs, f32 accumulation.
    #     (1/sqrt(head_dim) already folded into wq / bq by the wrapper.)
    q = jnp.dot(xq_bf, wq_ref[...], preferred_element_type=f32) + bq    # (Nq, Epc)
    k = jnp.dot(xkv_bf, wk_ref[...], preferred_element_type=f32) + bk   # (Nk, Epc)
    v = jnp.dot(xkv_bf, wv_ref[...], preferred_element_type=f32) + bv   # (Nk, Epc)

    # --- Head split.
    # K is pre-oriented with ONE 2-D transpose, then tile-aligned per-head
    # sublane slices -> (H, Dh, Nk): the score contraction below is a plain
    # batched (n,d)@(d,m) MXU op with no implicit per-head transpose.
    kT = k.T                                                             # (Epc, Nk)
    kh_t = jnp.stack([kT[h * Dh:(h + 1) * Dh, :] for h in range(H)],
                     axis=0).astype(bf16)                                # (H, Dh, Nk)
    qh = jnp.stack([q[:, h * Dh:(h + 1) * Dh] for h in range(H)],
                   axis=0).astype(bf16)                                  # (H, Nq, Dh)
    vh = jnp.stack([v[:, h * Dh:(h + 1) * Dh] for h in range(H)],
                   axis=0).astype(bf16)                                  # (H, Nk, Dh)

    # --- One batched score contraction for all heads and all rows.
    s = jnp.einsum('hnd,hdm->hnm', qh, kh_t,
                   preferred_element_type=f32)                           # (H, Nq, Nk)

    # --- Cross-batch mask built in-kernel (rows/cols are (seq, batch)
    #     ordered, so batch id == index % batch).  No (Nq, Nk) HBM input.
    row_b = jax.lax.broadcasted_iota(jnp.int32, (Nq, Nk), 0) % batch
    col_b = jax.lax.broadcasted_iota(jnp.int32, (Nq, Nk), 1) % batch
    bias = jnp.where(row_b == col_b, 0.0, -1e30).astype(f32)             # (Nq, Nk)
    s = s + bias                                                         # bcast over H

    # --- Single softmax over keys (f32, exact divide).
    m = jnp.max(s, axis=-1, keepdims=True)
    p = jnp.exp(s - m)
    p = p / jnp.sum(p, axis=-1, keepdims=True)

    # --- Batched P @ V, merge heads back to (Nq, Epc).
    attn_h = jnp.einsum('hnm,hmd->hnd', p.astype(bf16), vh,
                        preferred_element_type=f32)                      # (H, Nq, Dh)
    attn = jnp.concatenate([attn_h[h] for h in range(H)], axis=-1)       # (Nq, Epc)

    # --- output projection.
    attn_out = jnp.dot(attn.astype(bf16), wo_ref[...],
                       preferred_element_type=f32) + bo

    # --- residual + LayerNorm1 (f32 elementwise).
    x1 = xq + attn_out
    mu1 = jnp.mean(x1, axis=-1, keepdims=True)
    var1 = jnp.mean((x1 - mu1) ** 2, axis=-1, keepdims=True)
    x1n = (x1 - mu1) * jax.lax.rsqrt(var1 + eps) * g1 + be1

    # --- feed forward: Linear -> ReLU -> Linear (dropout = identity).
    h1 = jnp.dot(x1n.astype(bf16), w1_ref[...], preferred_element_type=f32) + bf1
    h1 = jnp.maximum(h1, 0.0)
    ff = jnp.dot(h1.astype(bf16), w2_ref[...], preferred_element_type=f32) + bf2

    # --- residual + LayerNorm2.
    x2 = x1n + ff
    mu2 = jnp.mean(x2, axis=-1, keepdims=True)
    var2 = jnp.mean((x2 - mu2) ** 2, axis=-1, keepdims=True)
    out = (x2 - mu2) * jax.lax.rsqrt(var2 + eps) * g2 + be2

    out_ref[...] = out.astype(out_ref.dtype)


# ----------------------------------------------------------------------------
# Wrapper
# ----------------------------------------------------------------------------
def cross_attention_forward(square_embeddings, piece_embeddings, params,
                            num_heads):
    """square_embeddings: (S, B, Esq); piece_embeddings: (L, B, Epc).
    Returns (L, B, Epc), matching the PyTorch module (dropout disabled)."""
    S, B, Esq = square_embeddings.shape
    L, _, Epc = piece_embeddings.shape
    head_dim = Epc // num_heads
    Eff = 4 * Epc
    Nq, Nk = L * B, S * B
    scale = 1.0 / math.sqrt(head_dim)

    bf16, f32 = jnp.bfloat16, jnp.float32

    # Seq-major flatten: a free, contiguous reshape -- no input transposes.
    # Row r of the slab belongs to batch (r % B).  Activations shipped bf16.
    xq2 = piece_embeddings.reshape(Nq, Epc).astype(bf16)
    xkv2 = square_embeddings.reshape(Nk, Esq).astype(bf16)

    # PyTorch Linear: y = x @ W.T + b -> pre-transpose; weights bf16 for the
    # MXU; attention scale folded into the Q projection.
    wq = (params["q_proj_w"].T * scale).astype(bf16)        # (Epc, Epc)
    wk = params["k_proj_w"].T.astype(bf16)                  # (Esq, Epc)
    wv = params["v_proj_w"].T.astype(bf16)                  # (Esq, Epc)
    wo = params["out_proj_w"].T.astype(bf16)                # (Epc, Epc)
    w1 = params["ff1_w"].T.astype(bf16)                     # (Epc, Eff)
    w2 = params["ff2_w"].T.astype(bf16)                     # (Eff, Epc)

    # One packed slab for all (Epc,)-sized biases / LN params (single DMA).
    vec_slab = jnp.stack([
        params["q_proj_b"] * scale,
        params["k_proj_b"],
        params["v_proj_b"],
        params["out_proj_b"],
        params["ln1_gamma"],
        params["ln1_beta"],
        params["ff2_b"],
        params["ln2_gamma"],
        params["ln2_beta"],
    ], axis=0).astype(f32)                                  # (9, Epc)
    bf1 = params["ff1_b"].reshape(1, Eff).astype(f32)       # (1, Eff)

    def full(shape):
        return pl.BlockSpec(shape, lambda i: (0, 0))

    kernel = functools.partial(_cross_attn_kernel, num_heads=num_heads,
                               head_dim=head_dim, batch=B, eps=1e-5)

    out2 = pl.pallas_call(
        kernel,
        out_shape=jax.ShapeDtypeStruct((Nq, Epc), jnp.float32),
        grid_spec=pltpu.PrefetchScalarGridSpec(
            num_scalar_prefetch=0,
            # Single grid step: batch folded into the matmul M dimension.
            # For large B / v7x megacore, chunk whole batches over a small
            # "parallel" axis here (weights kept at constant block index).
            grid=(1,),
            in_specs=[
                full((Nq, Epc)),        # piece embeddings (flattened, bf16)
                full((Nk, Esq)),        # square embeddings (flattened, bf16)
                full((Epc, Epc)),       # wq (scaled)
                full((Esq, Epc)),       # wk
                full((Esq, Epc)),       # wv
                full((Epc, Epc)),       # wo
                full((Epc, Eff)),       # ff1 W
                full((Eff, Epc)),       # ff2 W
                full((9, Epc)),         # packed biases / LN params
                full((1, Eff)),         # ff1 bias
            ],
            out_specs=full((Nq, Epc)),
        ),
        compiler_params=pltpu.CompilerParams(
            dimension_semantics=("arbitrary",),
            vmem_limit_bytes=32 * 1024 * 1024),
    )(xq2, xkv2, wq, wk, wv, wo, w1, w2, vec_slab, bf1)

    # Rows are (seq, batch) ordered -> this reshape IS the module's
    # (num_pieces, batch, pc_embed_dim) output; no output transpose needed.
    return out2.reshape(L, B, Epc)


# ----------------------------------------------------------------------------
# Pure-JAX f32 reference (same math) for a sanity check
# ----------------------------------------------------------------------------
def reference_forward(square_embeddings, piece_embeddings, params, num_heads):
    S, B, Esq = square_embeddings.shape
    L, _, Epc = piece_embeddings.shape
    Dh = Epc // num_heads
    xq = jnp.transpose(piece_embeddings, (1, 0, 2))    # (B, L, Epc)
    xkv = jnp.transpose(square_embeddings, (1, 0, 2))  # (B, S, Esq)

    q = xq @ params["q_proj_w"].T + params["q_proj_b"]
    k = xkv @ params["k_proj_w"].T + params["k_proj_b"]
    v = xkv @ params["v_proj_w"].T + params["v_proj_b"]

    qh = q.reshape(B, L, num_heads, Dh).transpose(0, 2, 1, 3)
    kh = k.reshape(B, S, num_heads, Dh).transpose(0, 2, 1, 3)
    vh = v.reshape(B, S, num_heads, Dh).transpose(0, 2, 1, 3)
    s = jnp.einsum("bhld,bhsd->bhls", qh, kh) / math.sqrt(Dh)
    p = jax.nn.softmax(s, axis=-1)
    attn = jnp.einsum("bhls,bhsd->bhld", p, vh).transpose(0, 2, 1, 3).reshape(B, L, Epc)
    attn = attn @ params["out_proj_w"].T + params["out_proj_b"]

    def ln(x, g, b):
        mu = jnp.mean(x, axis=-1, keepdims=True)
        var = jnp.mean((x - mu) ** 2, axis=-1, keepdims=True)
        return (x - mu) * jax.lax.rsqrt(var + 1e-5) * g + b

    x1 = ln(xq + attn, params["ln1_gamma"], params["ln1_beta"])
    h1 = jnp.maximum(x1 @ params["ff1_w"].T + params["ff1_b"], 0.0)
    ff = h1 @ params["ff2_w"].T + params["ff2_b"]
    x2 = ln(x1 + ff, params["ln2_gamma"], params["ln2_beta"])
    return jnp.transpose(x2, (1, 0, 2))


# ----------------------------------------------------------------------------
# Deterministic parameter init (same shapes as the PyTorch __init__)
# ----------------------------------------------------------------------------
def init_params(key, sq_embed_dim, pc_embed_dim):
    ks = jax.random.split(key, 8)
    E, K = pc_embed_dim, sq_embed_dim
    n = lambda k, shape: (jax.random.normal(k, shape, jnp.float32) * 0.02)
    return {
        "q_proj_w": n(ks[0], (E, E)),   "q_proj_b": jnp.zeros((E,), jnp.float32),
        "k_proj_w": n(ks[1], (E, K)),   "k_proj_b": jnp.zeros((E,), jnp.float32),
        "v_proj_w": n(ks[2], (E, K)),   "v_proj_b": jnp.zeros((E,), jnp.float32),
        "out_proj_w": n(ks[3], (E, E)), "out_proj_b": jnp.zeros((E,), jnp.float32),
        "ln1_gamma": jnp.ones((E,), jnp.float32), "ln1_beta": jnp.zeros((E,), jnp.float32),
        "ff1_w": n(ks[4], (4 * E, E)),  "ff1_b": n(ks[5], (4 * E,)),
        "ff2_w": n(ks[6], (E, 4 * E)),  "ff2_b": n(ks[7], (E,)),
        "ln2_gamma": jnp.ones((E,), jnp.float32), "ln2_beta": jnp.zeros((E,), jnp.float32),
    }


if __name__ == "__main__":
    # small shapes consistent with the module's forward signature
    B = 2            # batch
    S = 16           # num_squares (key/value sequence)
    L = 8            # num_current_pieces (query sequence)
    sq_embed_dim = 16
    pc_embed_dim = 32
    num_heads = 4

    key = jax.random.PRNGKey(0)
    k1, k2, k3 = jax.random.split(key, 3)
    square_embeddings = jax.random.normal(k1, (S, B, sq_embed_dim), jnp.float32)
    piece_embeddings = jax.random.normal(k2, (L, B, pc_embed_dim), jnp.float32)
    params = init_params(k3, sq_embed_dim, pc_embed_dim)

    out = cross_attention_forward(square_embeddings, piece_embeddings, params,
                                  num_heads)
    out = jax.block_until_ready(out)

    ref = reference_forward(square_embeddings, piece_embeddings, params, num_heads)
    assert out.shape == (L, B, pc_embed_dim)
    # bf16 activations/weights at the MXU vs an all-f32 reference.
    assert jnp.allclose(out, ref, atol=5e-2, rtol=5e-2), "mismatch vs reference"

    print("KERNEL_OK")
</pallas_src>

<mosaic_0001>
module attributes {stable_mosaic.version = 11 : i64} {
  func.func @_cross_attn_kernel(%arg0: i32, %arg1: memref<16x32xbf16, #tpu.memory_space<vmem>>, %arg2: memref<32x16xbf16, #tpu.memory_space<vmem>>, %arg3: memref<32x32xbf16, #tpu.memory_space<vmem>>, %arg4: memref<16x32xbf16, #tpu.memory_space<vmem>>, %arg5: memref<16x32xbf16, #tpu.memory_space<vmem>>, %arg6: memref<32x32xbf16, #tpu.memory_space<vmem>>, %arg7: memref<32x128xbf16, #tpu.memory_space<vmem>>, %arg8: memref<128x32xbf16, #tpu.memory_space<vmem>>, %arg9: memref<9x32xf32, #tpu.memory_space<vmem>>, %arg10: memref<1x128xf32, #tpu.memory_space<vmem>>, %arg11: memref<16x32xf32, #tpu.memory_space<vmem>>) attributes {dimension_semantics = [#tpu.dimension_semantics<arbitrary>], iteration_bounds = array<i64: 1>, scalar_prefetch = 0 : i64, scratch_operands = 0 : i64, tpu.core_type = #tpu.core_type<tc>, window_params = [{pipeline_mode = #tpu.pipeline_mode<synchronous>, transform_indices = @transform_0, window_bounds = array<i64: 16, 32>}, {pipeline_mode = #tpu.pipeline_mode<synchronous>, transform_indices = @transform_1, window_bounds = array<i64: 32, 16>}, {pipeline_mode = #tpu.pipeline_mode<synchronous>, transform_indices = @transform_2, window_bounds = array<i64: 32, 32>}, {pipeline_mode = #tpu.pipeline_mode<synchronous>, transform_indices = @transform_3, window_bounds = array<i64: 16, 32>}, {pipeline_mode = #tpu.pipeline_mode<synchronous>, transform_indices = @transform_4, window_bounds = array<i64: 16, 32>}, {pipeline_mode = #tpu.pipeline_mode<synchronous>, transform_indices = @transform_5, window_bounds = array<i64: 32, 32>}, {pipeline_mode = #tpu.pipeline_mode<synchronous>, transform_indices = @transform_6, window_bounds = array<i64: 32, 128>}, {pipeline_mode = #tpu.pipeline_mode<synchronous>, transform_indices = @transform_7, window_bounds = array<i64: 128, 32>}, {pipeline_mode = #tpu.pipeline_mode<synchronous>, transform_indices = @transform_8, window_bounds = array<i64: 9, 32>}, {pipeline_mode = #tpu.pipeline_mode<synchronous>, transform_indices = @transform_9, window_bounds = array<i64: 1, 128>}, {pipeline_mode = #tpu.pipeline_mode<synchronous>, transform_indices = @transform_10, window_bounds = array<i64: 16, 32>}]} {
    %c0 = arith.constant 0 : index
    %c0_0 = arith.constant 0 : index
    %0 = vector.load %arg1[%c0, %c0_0] : memref<16x32xbf16, #tpu.memory_space<vmem>>, vector<16x32xbf16>
    %c0_1 = arith.constant 0 : index
    %c0_2 = arith.constant 0 : index
    %1 = vector.load %arg2[%c0_1, %c0_2] : memref<32x16xbf16, #tpu.memory_space<vmem>>, vector<32x16xbf16>
    %2 = arith.extf %0 : vector<16x32xbf16> to vector<16x32xf32>
    %c0_3 = arith.constant 0 : index
    %c0_4 = arith.constant 0 : index
    %3 = vector.load %arg9[%c0_3, %c0_4] : memref<9x32xf32, #tpu.memory_space<vmem>>, vector<1x32xf32>
    %c1 = arith.constant 1 : index
    %c0_5 = arith.constant 0 : index
    %4 = vector.load %arg9[%c1, %c0_5] : memref<9x32xf32, #tpu.memory_space<vmem>>, vector<1x32xf32>
    %c2 = arith.constant 2 : index
    %c0_6 = arith.constant 0 : index
    %5 = vector.load %arg9[%c2, %c0_6] : memref<9x32xf32, #tpu.memory_space<vmem>>, vector<1x32xf32>
    %c3 = arith.constant 3 : index
    %c0_7 = arith.constant 0 : index
    %6 = vector.load %arg9[%c3, %c0_7] : memref<9x32xf32, #tpu.memory_space<vmem>>, vector<1x32xf32>
    %c4 = arith.constant 4 : index
    %c0_8 = arith.constant 0 : index
    %7 = vector.load %arg9[%c4, %c0_8] : memref<9x32xf32, #tpu.memory_space<vmem>>, vector<1x32xf32>
    %c5 = arith.constant 5 : index
    %c0_9 = arith.constant 0 : index
    %8 = vector.load %arg9[%c5, %c0_9] : memref<9x32xf32, #tpu.memory_space<vmem>>, vector<1x32xf32>
    %c6 = arith.constant 6 : index
    %c0_10 = arith.constant 0 : index
    %9 = vector.load %arg9[%c6, %c0_10] : memref<9x32xf32, #tpu.memory_space<vmem>>, vector<1x32xf32>
    %c7 = arith.constant 7 : index
    %c0_11 = arith.constant 0 : index
    %10 = vector.load %arg9[%c7, %c0_11] : memref<9x32xf32, #tpu.memory_space<vmem>>, vector<1x32xf32>
    %c8 = arith.constant 8 : index
    %c0_12 = arith.constant 0 : index
    %11 = vector.load %arg9[%c8, %c0_12] : memref<9x32xf32, #tpu.memory_space<vmem>>, vector<1x32xf32>
    %c0_13 = arith.constant 0 : index
    %c0_14 = arith.constant 0 : index
    %12 = vector.load %arg10[%c0_13, %c0_14] : memref<1x128xf32, #tpu.memory_space<vmem>>, vector<1x128xf32>
    %c0_15 = arith.constant 0 : index
    %c0_16 = arith.constant 0 : index
    %13 = vector.load %arg3[%c0_15, %c0_16] : memref<32x32xbf16, #tpu.memory_space<vmem>>, vector<32x32xbf16>
    %cst = arith.constant dense<0.000000e+00> : vector<16x32xf32>
    %14 = tpu.matmul %0, %13, %cst {dimension_numbers = #tpu.dot_dimension_numbers<[1], [0], [0], [1], [0, 0, 1, 1], [], []>} : vector<16x32xbf16>, vector<32x32xbf16>, vector<16x32xf32> -> vector<16x32xf32>
    %15 = vector.broadcast %3 : vector<1x32xf32> to vector<16x32xf32>
    %16 = arith.addf %14, %15 : vector<16x32xf32>
    %c0_17 = arith.constant 0 : index
    %c0_18 = arith.constant 0 : index
    %17 = vector.load %arg4[%c0_17, %c0_18] : memref<16x32xbf16, #tpu.memory_space<vmem>>, vector<16x32xbf16>
    %cst_19 = arith.constant dense<0.000000e+00> : vector<32x32xf32>
    %18 = tpu.matmul %1, %17, %cst_19 {dimension_numbers = #tpu.dot_dimension_numbers<[1], [0], [0], [1], [0, 0, 1, 1], [], []>} : vector<32x16xbf16>, vector<16x32xbf16>, vector<32x32xf32> -> vector<32x32xf32>
    %19 = vector.broadcast %4 : vector<1x32xf32> to vector<32x32xf32>
    %20 = arith.addf %18, %19 : vector<32x32xf32>
    %c0_20 = arith.constant 0 : index
    %c0_21 = arith.constant 0 : index
    %21 = vector.load %arg5[%c0_20, %c0_21] : memref<16x32xbf16, #tpu.memory_space<vmem>>, vector<16x32xbf16>
    %cst_22 = arith.constant dense<0.000000e+00> : vector<32x32xf32>
    %22 = tpu.matmul %1, %21, %cst_22 {dimension_numbers = #tpu.dot_dimension_numbers<[1], [0], [0], [1], [0, 0, 1, 1], [], []>} : vector<32x16xbf16>, vector<16x32xbf16>, vector<32x32xf32> -> vector<32x32xf32>
    %23 = vector.broadcast %5 : vector<1x32xf32> to vector<32x32xf32>
    %24 = arith.addf %22, %23 : vector<32x32xf32>
    %25 = tpu.transpose %20, [1, 0] : vector<32x32xf32> -> vector<32x32xf32>
    %26 = vector.extract_strided_slice %25 {offsets = [0, 0], sizes = [8, 32], strides = [1, 1]} : vector<32x32xf32> to vector<8x32xf32>
    %27 = vector.extract_strided_slice %25 {offsets = [8, 0], sizes = [8, 32], strides = [1, 1]} : vector<32x32xf32> to vector<8x32xf32>
    %28 = vector.extract_strided_slice %25 {offsets = [16, 0], sizes = [8, 32], strides = [1, 1]} : vector<32x32xf32> to vector<8x32xf32>
    %29 = vector.extract_strided_slice %25 {offsets = [24, 0], sizes = [8, 32], strides = [1, 1]} : vector<32x32xf32> to vector<8x32xf32>
    %30 = vector.shape_cast %26 : vector<8x32xf32> to vector<1x8x32xf32>
    %31 = vector.shape_cast %27 : vector<8x32xf32> to vector<1x8x32xf32>
    %32 = vector.shape_cast %28 : vector<8x32xf32> to vector<1x8x32xf32>
    %33 = vector.shape_cast %29 : vector<8x32xf32> to vector<1x8x32xf32>
    %34 = tpu.concatenate %30, %31, %32, %33 in 0 : vector<1x8x32xf32>, vector<1x8x32xf32>, vector<1x8x32xf32>, vector<1x8x32xf32> -> vector<4x8x32xf32>
    %35 = arith.truncf %34 : vector<4x8x32xf32> to vector<4x8x32xbf16>
    %36 = vector.extract_strided_slice %16 {offsets = [0, 0], sizes = [16, 8], strides = [1, 1]} : vector<16x32xf32> to vector<16x8xf32>
    %37 = vector.extract_strided_slice %16 {offsets = [0, 8], sizes = [16, 8], strides = [1, 1]} : vector<16x32xf32> to vector<16x8xf32>
    %38 = vector.extract_strided_slice %16 {offsets = [0, 16], sizes = [16, 8], strides = [1, 1]} : vector<16x32xf32> to vector<16x8xf32>
    %39 = vector.extract_strided_slice %16 {offsets = [0, 24], sizes = [16, 8], strides = [1, 1]} : vector<16x32xf32> to vector<16x8xf32>
    %40 = vector.shape_cast %36 : vector<16x8xf32> to vector<1x16x8xf32>
    %41 = vector.shape_cast %37 : vector<16x8xf32> to vector<1x16x8xf32>
    %42 = vector.shape_cast %38 : vector<16x8xf32> to vector<1x16x8xf32>
    %43 = vector.shape_cast %39 : vector<16x8xf32> to vector<1x16x8xf32>
    %44 = tpu.concatenate %40, %41, %42, %43 in 0 : vector<1x16x8xf32>, vector<1x16x8xf32>, vector<1x16x8xf32>, vector<1x16x8xf32> -> vector<4x16x8xf32>
    %45 = arith.truncf %44 : vector<4x16x8xf32> to vector<4x16x8xbf16>
    %46 = vector.extract_strided_slice %24 {offsets = [0, 0], sizes = [32, 8], strides = [1, 1]} : vector<32x32xf32> to vector<32x8xf32>
    %47 = vector.extract_strided_slice %24 {offsets = [0, 8], sizes = [32, 8], strides = [1, 1]} : vector<32x32xf32> to vector<32x8xf32>
    %48 = vector.extract_strided_slice %24 {offsets = [0, 16], sizes = [32, 8], strides = [1, 1]} : vector<32x32xf32> to vector<32x8xf32>
    %49 = vector.extract_strided_slice %24 {offsets = [0, 24], sizes = [32, 8], strides = [1, 1]} : vector<32x32xf32> to vector<32x8xf32>
    %50 = vector.shape_cast %46 : vector<32x8xf32> to vector<1x32x8xf32>
    %51 = vector.shape_cast %47 : vector<32x8xf32> to vector<1x32x8xf32>
    %52 = vector.shape_cast %48 : vector<32x8xf32> to vector<1x32x8xf32>
    %53 = vector.shape_cast %49 : vector<32x8xf32> to vector<1x32x8xf32>
    %54 = tpu.concatenate %50, %51, %52, %53 in 0 : vector<1x32x8xf32>, vector<1x32x8xf32>, vector<1x32x8xf32>, vector<1x32x8xf32> -> vector<4x32x8xf32>
    %55 = arith.truncf %54 : vector<4x32x8xf32> to vector<4x32x8xbf16>
    "tpu.trace_start"() <{level = 10 : i32, message = "hnd,hdm->hnm"}> : () -> ()
    %cst_23 = arith.constant dense<0.000000e+00> : vector<4x16x32xf32>
    %56 = tpu.matmul %45, %35, %cst_23 {dimension_numbers = #tpu.dot_dimension_numbers<[2], [1], [1], [2], [0, 0, 0, 1, 1, 2], [0], [0]>} : vector<4x16x8xbf16>, vector<4x8x32xbf16>, vector<4x16x32xf32> -> vector<4x16x32xf32>
    "tpu.trace_stop"() : () -> ()
    %57 = tpu.iota {dimensions = array<i32: 0>} : vector<16x32xi32>
    %c2_i32 = arith.constant 2 : i32
    %c0_i32 = arith.constant 0 : i32
    %58 = arith.cmpi eq, %c2_i32, %c0_i32 : i32
    %c1_i32 = arith.constant 1 : i32
    %59 = arith.select %58, %c1_i32, %c2_i32 : i32
    %60 = vector.broadcast %59 : i32 to vector<16x32xi32>
    %61 = arith.remsi %57, %60 : vector<16x32xi32>
    %c0_i32_24 = arith.constant 0 : i32
    %62 = vector.broadcast %c0_i32_24 : i32 to vector<16x32xi32>
    %63 = arith.cmpi ne, %61, %62 : vector<16x32xi32>
    %c0_i32_25 = arith.constant 0 : i32
    %64 = vector.broadcast %c0_i32_25 : i32 to vector<16x32xi32>
    %65 = arith.cmpi slt, %61, %64 : vector<16x32xi32>
    %c0_i32_26 = arith.constant 0 : i32
    %66 = arith.cmpi slt, %59, %c0_i32_26 : i32
    %67 = vector.broadcast %66 : i1 to vector<16x32xi1>
    %68 = vector.broadcast %67 : vector<16x32xi1> to vector<16x32xi1>
    %69 = arith.xori %65, %68 : vector<16x32xi1>
    %70 = arith.andi %69, %63 : vector<16x32xi1>
    %71 = vector.broadcast %59 : i32 to vector<16x32xi32>
    %72 = arith.addi %61, %71 : vector<16x32xi32>
    %73 = arith.select %70, %72, %61 : vector<16x32xi1>, vector<16x32xi32>
    %74 = tpu.iota {dimensions = array<i32: 1>} : vector<16x32xi32>
    %c2_i32_27 = arith.constant 2 : i32
    %c0_i32_28 = arith.constant 0 : i32
    %75 = arith.cmpi eq, %c2_i32_27, %c0_i32_28 : i32
    %c1_i32_29 = arith.constant 1 : i32
    %76 = arith.select %75, %c1_i32_29, %c2_i32_27 : i32
    %77 = vector.broadcast %76 : i32 to vector<16x32xi32>
    %78 = arith.remsi %74, %77 : vector<16x32xi32>
    %c0_i32_30 = arith.constant 0 : i32
    %79 = vector.broadcast %c0_i32_30 : i32 to vector<16x32xi32>
    %80 = arith.cmpi ne, %78, %79 : vector<16x32xi32>
    %c0_i32_31 = arith.constant 0 : i32
    %81 = vector.broadcast %c0_i32_31 : i32 to vector<16x32xi32>
    %82 = arith.cmpi slt, %78, %81 : vector<16x32xi32>
    %c0_i32_32 = arith.constant 0 : i32
    %83 = arith.cmpi slt, %76, %c0_i32_32 : i32
    %84 = vector.broadcast %83 : i1 to vector<16x32xi1>
    %85 = vector.broadcast %84 : vector<16x32xi1> to vector<16x32xi1>
    %86 = arith.xori %82, %85 : vector<16x32xi1>
    %87 = arith.andi %86, %80 : vector<16x32xi1>
    %88 = vector.broadcast %76 : i32 to vector<16x32xi32>
    %89 = arith.addi %78, %88 : vector<16x32xi32>
    %90 = arith.select %87, %89, %78 : vector<16x32xi1>, vector<16x32xi32>
    %91 = arith.cmpi eq, %73, %90 : vector<16x32xi32>
    %cst_33 = arith.constant 0.000000e+00 : f32
    %cst_34 = arith.constant -1.000000e+30 : f32
    %92 = vector.broadcast %cst_33 : f32 to vector<16x32xf32>
    %93 = vector.broadcast %cst_34 : f32 to vector<16x32xf32>
    %94 = arith.select %91, %92, %93 : vector<16x32xi1>, vector<16x32xf32>
    %95 = vector.shape_cast %94 : vector<16x32xf32> to vector<1x16x32xf32>
    %96 = vector.broadcast %95 : vector<1x16x32xf32> to vector<4x16x32xf32>
    %97 = arith.addf %56, %96 : vector<4x16x32xf32>
    %cst_35 = arith.constant dense<0xFF800000> : vector<4x16xf32>
    %98 = vector.multi_reduction <maximumf>, %97, %cst_35 [2] : vector<4x16x32xf32> to vector<4x16xf32>
    %99 = vector.shape_cast %98 : vector<4x16xf32> to vector<4x16x1xf32>
    %100 = vector.broadcast %99 : vector<4x16x1xf32> to vector<4x16x32xf32>
    %101 = arith.subf %97, %100 : vector<4x16x32xf32>
    %102 = math.exp %101 : vector<4x16x32xf32>
    %cst_36 = arith.constant dense<0.000000e+00> : vector<4x16xf32>
    %103 = vector.multi_reduction <add>, %102, %cst_36 [2] : vector<4x16x32xf32> to vector<4x16xf32>
    %104 = vector.shape_cast %103 : vector<4x16xf32> to vector<4x16x1xf32>
    %105 = vector.broadcast %104 : vector<4x16x1xf32> to vector<4x16x32xf32>
    %106 = arith.divf %102, %105 : vector<4x16x32xf32>
    %107 = arith.truncf %106 : vector<4x16x32xf32> to vector<4x16x32xbf16>
    "tpu.trace_start"() <{level = 10 : i32, message = "hnm,hmd->hnd"}> : () -> ()
    %cst_37 = arith.constant dense<0.000000e+00> : vector<4x16x8xf32>
    %108 = tpu.matmul %107, %55, %cst_37 {dimension_numbers = #tpu.dot_dimension_numbers<[2], [1], [1], [2], [0, 0, 0, 1, 1, 2], [0], [0]>} : vector<4x16x32xbf16>, vector<4x32x8xbf16>, vector<4x16x8xf32> -> vector<4x16x8xf32>
    "tpu.trace_stop"() : () -> ()
    %109 = vector.extract_strided_slice %108 {offsets = [0, 0, 0], sizes = [1, 16, 8], strides = [1, 1, 1]} : vector<4x16x8xf32> to vector<1x16x8xf32>
    %110 = vector.shape_cast %109 : vector<1x16x8xf32> to vector<16x8xf32>
    %111 = vector.extract_strided_slice %108 {offsets = [1, 0, 0], sizes = [1, 16, 8], strides = [1, 1, 1]} : vector<4x16x8xf32> to vector<1x16x8xf32>
    %112 = vector.shape_cast %111 : vector<1x16x8xf32> to vector<16x8xf32>
    %113 = vector.extract_strided_slice %108 {offsets = [2, 0, 0], sizes = [1, 16, 8], strides = [1, 1, 1]} : vector<4x16x8xf32> to vector<1x16x8xf32>
    %114 = vector.shape_cast %113 : vector<1x16x8xf32> to vector<16x8xf32>
    %115 = vector.extract_strided_slice %108 {offsets = [3, 0, 0], sizes = [1, 16, 8], strides = [1, 1, 1]} : vector<4x16x8xf32> to vector<1x16x8xf32>
    %116 = vector.shape_cast %115 : vector<1x16x8xf32> to vector<16x8xf32>
    %117 = tpu.concatenate %110, %112, %114, %116 in 1 : vector<16x8xf32>, vector<16x8xf32>, vector<16x8xf32>, vector<16x8xf32> -> vector<16x32xf32>
    %118 = arith.truncf %117 : vector<16x32xf32> to vector<16x32xbf16>
    %c0_38 = arith.constant 0 : index
    %c0_39 = arith.constant 0 : index
    %119 = vector.load %arg6[%c0_38, %c0_39] : memref<32x32xbf16, #tpu.memory_space<vmem>>, vector<32x32xbf16>
    %cst_40 = arith.constant dense<0.000000e+00> : vector<16x32xf32>
    %120 = tpu.matmul %118, %119, %cst_40 {dimension_numbers = #tpu.dot_dimension_numbers<[1], [0], [0], [1], [0, 0, 1, 1], [], []>} : vector<16x32xbf16>, vector<32x32xbf16>, vector<16x32xf32> -> vector<16x32xf32>
    %121 = vector.broadcast %6 : vector<1x32xf32> to vector<16x32xf32>
    %122 = arith.addf %120, %121 : vector<16x32xf32>
    %123 = arith.addf %2, %122 : vector<16x32xf32>
    %cst_41 = arith.constant dense<0.000000e+00> : vector<16xf32>
    %124 = vector.multi_reduction <add>, %123, %cst_41 [1] : vector<16x32xf32> to vector<16xf32>
    %125 = vector.shape_cast %124 : vector<16xf32> to vector<16x1xf32>
    %cst_42 = arith.constant 3.200000e+01 : f32
    %126 = vector.broadcast %cst_42 : f32 to vector<16x1xf32>
    %127 = arith.divf %125, %126 : vector<16x1xf32>
    %128 = vector.broadcast %127 : vector<16x1xf32> to vector<16x32xf32>
    %129 = arith.subf %123, %128 : vector<16x32xf32>
    %130 = arith.mulf %129, %129 : vector<16x32xf32>
    %cst_43 = arith.constant dense<0.000000e+00> : vector<16xf32>
    %131 = vector.multi_reduction <add>, %130, %cst_43 [1] : vector<16x32xf32> to vector<16xf32>
    %132 = vector.shape_cast %131 : vector<16xf32> to vector<16x1xf32>
    %cst_44 = arith.constant 3.200000e+01 : f32
    %133 = vector.broadcast %cst_44 : f32 to vector<16x1xf32>
    %134 = arith.divf %132, %133 : vector<16x1xf32>
    %135 = vector.broadcast %127 : vector<16x1xf32> to vector<16x32xf32>
    %136 = arith.subf %123, %135 : vector<16x32xf32>
    %cst_45 = arith.constant 9.99999974E-6 : f32
    %137 = vector.broadcast %cst_45 : f32 to vector<16x1xf32>
    %138 = arith.addf %134, %137 : vector<16x1xf32>
    %139 = math.rsqrt %138 : vector<16x1xf32>
    %140 = vector.broadcast %139 : vector<16x1xf32> to vector<16x32xf32>
    %141 = arith.mulf %136, %140 : vector<16x32xf32>
    %142 = vector.broadcast %7 : vector<1x32xf32> to vector<16x32xf32>
    %143 = arith.mulf %141, %142 : vector<16x32xf32>
    %144 = vector.broadcast %8 : vector<1x32xf32> to vector<16x32xf32>
    %145 = arith.addf %143, %144 : vector<16x32xf32>
    %146 = arith.truncf %145 : vector<16x32xf32> to vector<16x32xbf16>
    %c0_46 = arith.constant 0 : index
    %c0_47 = arith.constant 0 : index
    %147 = vector.load %arg7[%c0_46, %c0_47] : memref<32x128xbf16, #tpu.memory_space<vmem>>, vector<32x128xbf16>
    %cst_48 = arith.constant dense<0.000000e+00> : vector<16x128xf32>
    %148 = tpu.matmul %146, %147, %cst_48 {dimension_numbers = #tpu.dot_dimension_numbers<[1], [0], [0], [1], [0, 0, 1, 1], [], []>} : vector<16x32xbf16>, vector<32x128xbf16>, vector<16x128xf32> -> vector<16x128xf32>
    %149 = vector.broadcast %12 : vector<1x128xf32> to vector<16x128xf32>
    %150 = arith.addf %148, %149 : vector<16x128xf32>
    %cst_49 = arith.constant 0.000000e+00 : f32
    %151 = vector.broadcast %cst_49 : f32 to vector<16x128xf32>
    %152 = arith.maximumf %150, %151 : vector<16x128xf32>
    %153 = arith.truncf %152 : vector<16x128xf32> to vector<16x128xbf16>
    %c0_50 = arith.constant 0 : index
    %c0_51 = arith.constant 0 : index
    %154 = vector.load %arg8[%c0_50, %c0_51] : memref<128x32xbf16, #tpu.memory_space<vmem>>, vector<128x32xbf16>
    %cst_52 = arith.constant dense<0.000000e+00> : vector<16x32xf32>
    %155 = tpu.matmul %153, %154, %cst_52 {dimension_numbers = #tpu.dot_dimension_numbers<[1], [0], [0], [1], [0, 0, 1, 1], [], []>} : vector<16x128xbf16>, vector<128x32xbf16>, vector<16x32xf32> -> vector<16x32xf32>
    %156 = vector.broadcast %9 : vector<1x32xf32> to vector<16x32xf32>
    %157 = arith.addf %155, %156 : vector<16x32xf32>
    %158 = arith.addf %145, %157 : vector<16x32xf32>
    %cst_53 = arith.constant dense<0.000000e+00> : vector<16xf32>
    %159 = vector.multi_reduction <add>, %158, %cst_53 [1] : vector<16x32xf32> to vector<16xf32>
    %160 = vector.shape_cast %159 : vector<16xf32> to vector<16x1xf32>
    %cst_54 = arith.constant 3.200000e+01 : f32
    %161 = vector.broadcast %cst_54 : f32 to vector<16x1xf32>
    %162 = arith.divf %160, %161 : vector<16x1xf32>
    %163 = vector.broadcast %162 : vector<16x1xf32> to vector<16x32xf32>
    %164 = arith.subf %158, %163 : vector<16x32xf32>
    %165 = arith.mulf %164, %164 : vector<16x32xf32>
    %cst_55 = arith.constant dense<0.000000e+00> : vector<16xf32>
    %166 = vector.multi_reduction <add>, %165, %cst_55 [1] : vector<16x32xf32> to vector<16xf32>
    %167 = vector.shape_cast %166 : vector<16xf32> to vector<16x1xf32>
    %cst_56 = arith.constant 3.200000e+01 : f32
    %168 = vector.broadcast %cst_56 : f32 to vector<16x1xf32>
    %169 = arith.divf %167, %168 : vector<16x1xf32>
    %170 = vector.broadcast %162 : vector<16x1xf32> to vector<16x32xf32>
    %171 = arith.subf %158, %170 : vector<16x32xf32>
    %cst_57 = arith.constant 9.99999974E-6 : f32
    %172 = vector.broadcast %cst_57 : f32 to vector<16x1xf32>
    %173 = arith.addf %169, %172 : vector<16x1xf32>
    %174 = math.rsqrt %173 : vector<16x1xf32>
    %175 = vector.broadcast %174 : vector<16x1xf32> to vector<16x32xf32>
    %176 = arith.mulf %171, %175 : vector<16x32xf32>
    %177 = vector.broadcast %10 : vector<1x32xf32> to vector<16x32xf32>
    %178 = arith.mulf %176, %177 : vector<16x32xf32>
    %179 = vector.broadcast %11 : vector<1x32xf32> to vector<16x32xf32>
    %180 = arith.addf %178, %179 : vector<16x32xf32>
    %c0_58 = arith.constant 0 : index
    %c0_59 = arith.constant 0 : index
    %181 = vector.load %arg11[%c0_58, %c0_59] : memref<16x32xf32, #tpu.memory_space<vmem>>, vector<16x32xf32>
    tpu.vector_store %arg11[%c0_58, %c0_59], %180 {strides = array<i32>} : memref<16x32xf32, #tpu.memory_space<vmem>>, vector<16x32xf32>,
    return
  }
  func.func @transform_0(%arg0: i32) -> (i32, i32) {
    %c0_i32 = arith.constant 0 : i32
    %c0_i32_0 = arith.constant 0 : i32
    %c0_i32_1 = arith.constant 0 : i32
    return %c0_i32, %c0_i32_0 : i32, i32
  }
  func.func @transform_1(%arg0: i32) -> (i32, i32) {
    %c0_i32 = arith.constant 0 : i32
    %c0_i32_0 = arith.constant 0 : i32
    %c0_i32_1 = arith.constant 0 : i32
    return %c0_i32, %c0_i32_0 : i32, i32
  }
  func.func @transform_2(%arg0: i32) -> (i32, i32) {
    %c0_i32 = arith.constant 0 : i32
    %c0_i32_0 = arith.constant 0 : i32
    %c0_i32_1 = arith.constant 0 : i32
    return %c0_i32, %c0_i32_0 : i32, i32
  }
  func.func @transform_3(%arg0: i32) -> (i32, i32) {
    %c0_i32 = arith.constant 0 : i32
    %c0_i32_0 = arith.constant 0 : i32
    %c0_i32_1 = arith.constant 0 : i32
    return %c0_i32, %c0_i32_0 : i32, i32
  }
  func.func @transform_4(%arg0: i32) -> (i32, i32) {
    %c0_i32 = arith.constant 0 : i32
    %c0_i32_0 = arith.constant 0 : i32
    %c0_i32_1 = arith.constant 0 : i32
    return %c0_i32, %c0_i32_0 : i32, i32
  }
  func.func @transform_5(%arg0: i32) -> (i32, i32) {
    %c0_i32 = arith.constant 0 : i32
    %c0_i32_0 = arith.constant 0 : i32
    %c0_i32_1 = arith.constant 0 : i32
    return %c0_i32, %c0_i32_0 : i32, i32
  }
  func.func @transform_6(%arg0: i32) -> (i32, i32) {
    %c0_i32 = arith.constant 0 : i32
    %c0_i32_0 = arith.constant 0 : i32
    %c0_i32_1 = arith.constant 0 : i32
    return %c0_i32, %c0_i32_0 : i32, i32
  }
  func.func @transform_7(%arg0: i32) -> (i32, i32) {
    %c0_i32 = arith.constant 0 : i32
    %c0_i32_0 = arith.constant 0 : i32
    %c0_i32_1 = arith.constant 0 : i32
    return %c0_i32, %c0_i32_0 : i32, i32
  }
  func.func @transform_8(%arg0: i32) -> (i32, i32) {
    %c0_i32 = arith.constant 0 : i32
    %c0_i32_0 = arith.constant 0 : i32
    %c0_i32_1 = arith.constant 0 : i32
    return %c0_i32, %c0_i32_0 : i32, i32
  }
  func.func @transform_9(%arg0: i32) -> (i32, i32) {
    %c0_i32 = arith.constant 0 : i32
    %c0_i32_0 = arith.constant 0 : i32
    %c0_i32_1 = arith.constant 0 : i32
    return %c0_i32, %c0_i32_0 : i32, i32
  }
  func.func @transform_10(%arg0: i32) -> (i32, i32) {
    %c0_i32 = arith.constant 0 : i32
    %c0_i32_0 = arith.constant 0 : i32
    %c0_i32_1 = arith.constant 0 : i32
    return %c0_i32, %c0_i32_0 : i32, i32
  }
}

</mosaic_0001>

<llo_original>
// kernel: tpu_custom_call.1
$region0: #{tpu_custom_call.1}
  #allocation0 [shape = 'u32[]', space=smem, size = 0x4, offset = 0x4, fixed_abs, tag = 'smem constant byte address 0x4 - core index']
  #allocation1 [shape = 'u32[144,128]{1,0:T(1,128)}', space=vmem, size = 0x12000, scoped, tag = 'internal scratch']
  %s0 = inlined_call_operand.vmem [shape: bf16[16,32], index: 0, kind: input, shape index: {}]
  %s1 = inlined_call_operand.vmem [shape: bf16[32,16], index: 1, kind: input, shape index: {}]
  %s2 = inlined_call_operand.vmem [shape: bf16[32,32], index: 2, kind: input, shape index: {}]
  %s3 = inlined_call_operand.vmem [shape: bf16[16,32], index: 3, kind: input, shape index: {}]
  %s4 = inlined_call_operand.vmem [shape: bf16[16,32], index: 4, kind: input, shape index: {}]
  %s5 = inlined_call_operand.vmem [shape: bf16[32,32], index: 5, kind: input, shape index: {}]
  %s6 = inlined_call_operand.vmem [shape: bf16[32,128], index: 6, kind: input, shape index: {}]
  %s7 = inlined_call_operand.vmem [shape: bf16[128,32], index: 7, kind: input, shape index: {}]
  %s8 = inlined_call_operand.vmem [shape: f32[9,32], index: 8, kind: input, shape index: {}]
  %s9 = inlined_call_operand.vmem [shape: f32[1,128], index: 9, kind: input, shape index: {}]
  %s10 = inlined_call_operand.hbm [shape: f32[16,32], index: 10, kind: output, shape index: {}]
  %s11 = sld [smem:[#allocation0]]
  $region50: #{tpu_custom_call.1} parent=0
    _
  %s13 = ssub.s32 1, %s11
  %s14 = scalar_select 0, %s13, %s11
  $region1: #{tpu_custom_call.1} parent=0
    #allocation2 [shape = 'u8[8192]{0}', space=vmem, size = 0x2000, scoped, tag = 'output window, operand 0, single buffered']
    #allocation3 [shape = 's32[1]{0}', space=sflag, size = 0x4, scoped, tag = 'scoped memory for tpu_custom_call.1']
    %15 = vsyncpa [#allocation3], 0
    // Predicated region
    $region2: #{tpu_custom_call.1} parent=1 // pred_check
      _
    $region3: #{tpu_custom_call.1} parent=1 // pred_check_branch
      %17 = sbr.rel (0) target = $region5
    $region4: #{tpu_custom_call.1} parent=1 // pred_region
      _
    $region5: #{tpu_custom_call.1} parent=1 // pred_fallthru
      _
    // Predicated region
    $region6: #{tpu_custom_call.1} parent=1 // pred_check
      _
    $region7: #{tpu_custom_call.1} parent=1 // pred_check_branch
      %19 = sbr.rel (0) target = $region9
    $region8: #{tpu_custom_call.1} parent=1 // pred_region
      _
    $region9: #{tpu_custom_call.1} parent=1 // pred_fallthru
      _
    // Predicated region
    $region10: #{tpu_custom_call.1} parent=1 // pred_check
      _
    $region11: #{tpu_custom_call.1} parent=1 // pred_check_branch
      %21 = sbr.rel (0) target = $region13
    $region12: #{tpu_custom_call.1} parent=1 // pred_region
      _
    $region13: #{tpu_custom_call.1} parent=1 // pred_fallthru
      _
    // Predicated region
    $region14: #{tpu_custom_call.1} parent=1 // pred_check
      _
    $region15: #{tpu_custom_call.1} parent=1 // pred_check_branch
      %23 = sbr.rel (0) target = $region17
    $region16: #{tpu_custom_call.1} parent=1 // pred_region
      _
    $region17: #{tpu_custom_call.1} parent=1 // pred_fallthru
      _
    // Predicated region
    $region18: #{tpu_custom_call.1} parent=1 // pred_check
      _
    $region19: #{tpu_custom_call.1} parent=1 // pred_check_branch
      %25 = sbr.rel (0) target = $region21
    $region20: #{tpu_custom_call.1} parent=1 // pred_region
      _
    $region21: #{tpu_custom_call.1} parent=1 // pred_fallthru
      _
    // Predicated region
    $region22: #{tpu_custom_call.1} parent=1 // pred_check
      _
    $region23: #{tpu_custom_call.1} parent=1 // pred_check_branch
      %27 = sbr.rel (0) target = $region25
    $region24: #{tpu_custom_call.1} parent=1 // pred_region
      _
    $region25: #{tpu_custom_call.1} parent=1 // pred_fallthru
      _
    // Predicated region
    $region26: #{tpu_custom_call.1} parent=1 // pred_check
      _
    $region27: #{tpu_custom_call.1} parent=1 // pred_check_branch
      %29 = sbr.rel (0) target = $region29
    $region28: #{tpu_custom_call.1} parent=1 // pred_region
      _
    $region29: #{tpu_custom_call.1} parent=1 // pred_fallthru
      _
    // Predicated region
    $region30: #{tpu_custom_call.1} parent=1 // pred_check
      _
    $region31: #{tpu_custom_call.1} parent=1 // pred_check_branch
      %31 = sbr.rel (0) target = $region33
    $region32: #{tpu_custom_call.1} parent=1 // pred_region
      _
    $region33: #{tpu_custom_call.1} parent=1 // pred_fallthru
      _
    // Predicated region
    $region34: #{tpu_custom_call.1} parent=1 // pred_check
      _
    $region35: #{tpu_custom_call.1} parent=1 // pred_check_branch
      %33 = sbr.rel (0) target = $region37
    $region36: #{tpu_custom_call.1} parent=1 // pred_region
      _
    $region37: #{tpu_custom_call.1} parent=1 // pred_fallthru
      _
    // Predicated region
    $region38: #{tpu_custom_call.1} parent=1 // pred_check
      _
    $region39: #{tpu_custom_call.1} parent=1 // pred_check_branch
      %35 = sbr.rel (0) target = $region41
    $region40: #{tpu_custom_call.1} parent=1 // pred_region
      _
    $region41: #{tpu_custom_call.1} parent=1 // pred_fallthru
      _
    %v37 = vld [vmem:[%s0] sm:$0xf]
    %v38 = vld [vmem:[%s0 + $0x4] sm:$0xf]
    %v39 = vld [vmem:[%s1] sm:$0xf]
    %v40 = vld [vmem:[%s1 + $0x4] sm:$0xf]
    %v41 = vld [vmem:[%s1 + $0x8] sm:$0xf]
    %v42 = vld [vmem:[%s1 + $0xc] sm:$0xf]
    %v43 = vunpack.c.l.bf16 %v37
    %v44 = vunpack.c.l.bf16 %v38
    %v45 = vld [vmem:[%s8] sm:$0x1]
    %v46 = vld [vmem:[%s8 + $0x1] sm:$0x1]
    %v47 = vld [vmem:[%s8 + $0x2] sm:$0x1]
    %v48 = vld [vmem:[%s8 + $0x3] sm:$0x1]
    %v49 = vld [vmem:[%s8 + $0x4] sm:$0x1]
    %v50 = vld [vmem:[%s8 + $0x5] sm:$0x1]
    %v51 = vld [vmem:[%s8 + $0x6] sm:$0x1]
    %v52 = vld [vmem:[%s8 + $0x7] sm:$0x1]
    %v53 = vld [vmem:[%s8 + $0x8] sm:$0x1]
    %v54 = vld [vmem:[%s9] sm:$0x1]
    %v55 = vld [vmem:[%s2] sm:$0xf]
    %v56 = vld [vmem:[%s2 + $0x4] sm:$0xf]
    %v57 = vld [vmem:[%s2 + $0x8] sm:$0xf]
    %v58 = vld [vmem:[%s2 + $0xc] sm:$0xf]
    %v59 = vlaneseq
    %v60 = vshrl.u32 %v59, 7
    %v61 = vsub.s32 0, %v60
    %v62 = vrot.slane %v45, %v61
    %v65 = vunpack.c.l.b16 %v37
    %v66 = vunpack.c.l.b16 %v38
    %v67 = vpack.c.b16 %v66, %v65
    %v72 = vunpack.c.l.b16 %v55
    %v73 = vunpack.c.l.b16 %v56
    %v74 = vunpack.c.l.b16 %v57
    %v75 = vunpack.c.l.b16 %v58
    %v76 = vpack.c.b16 %v73, %v72
    %v77 = vpack.c.b16 %v75, %v74
    %vm80 = vcmask 261120
    %v82 = vsel %vm80, %v67, 0
    %84 = vmatprep.subr.bf16.mxu0 0
    %85 = vmatpush1.bf16.msra.mxu0 %v76
    %86 = vmatprep.subr.bf16.mxu0 0
    %87 = vmatpush1.bf16.msra.mxu0 %v77
    %88 = vmatprep.subr.bf16.mxu0 0
    %89 = vmatpush1.bf16.msra.mxu0 0
    %90 = vmatprep.subr.bf16.mxu0 0
    %91 = vmatpush1.bf16.msra.mxu0 0
    %92 = vmatprep.subr.bf16.mxu0 0
    %93 = vmatpush1.bf16.msra.mxu0 0
    %94 = vmatprep.subr.bf16.mxu0 0
    %95 = vmatpush1.bf16.msra.mxu0 0
    %96 = vmatprep.subr.bf16.mxu0 0
    %97 = vmatpush1.bf16.msra.mxu0 0
    %98 = vmatprep.subr.bf16.mxu0 0
    %99 = vmatpush1.bf16.msra.mxu0 0
    %100 = vmatprep.subr.bf16.mxu0 0
    %101 = vmatpush1.bf16.msra.mxu0 0
    %102 = vmatprep.subr.bf16.mxu0 0
    %103 = vmatpush1.bf16.msra.mxu0 0
    %104 = vmatprep.subr.bf16.mxu0 0
    %105 = vmatpush1.bf16.msra.mxu0 0
    %106 = vmatprep.subr.bf16.mxu0 0
    %107 = vmatpush1.bf16.msra.mxu0 0
    %108 = vmatprep.subr.bf16.mxu0 0
    %109 = vmatpush1.bf16.msra.mxu0 0
    %110 = vmatprep.subr.bf16.mxu0 0
    %111 = vmatpush1.bf16.msra.mxu0 0
    %112 = vmatprep.subr.bf16.mxu0 0
    %113 = vmatpush1.bf16.msra.mxu0 0
    %114 = vmatprep.subr.bf16.mxu0 0
    %115 = vmatpush1.bf16.msra.mxu0 0
    %116 = vmatprep.mubr.bf16.mxu0 0
    %117 = vmatmul.mubr.bf16.gmra.mrb[0].mxu0 %v82
    %v118 = vpop.f32.mrb[0].mxu0
    %v119 = vadd.f32 %v62, %v118
    %v120 = vpop.f32.mrb[0].mxu0
    %v121 = vpop.f32.mrb[0].mxu0
    %v122 = vadd.f32 %v62, %v121
    %v123 = vpop.f32.mrb[0].mxu0
    %124 = vdwg.mxu0
    %v125 = vld [vmem:[%s3] sm:$0xf]
    %v126 = vld [vmem:[%s3 + $0x4] sm:$0xf]
    %v127 = vlaneseq
    %v128 = vshrl.u32 %v127, 7
    %v129 = vsub.s32 0, %v128
    %v130 = vrot.slane %v46, %v129
    %v135 = vunpack.c.l.b16 %v39
    %v136 = vunpack.c.l.b16 %v40
    %v137 = vunpack.c.l.b16 %v41
    %v138 = vunpack.c.l.b16 %v42
    %v139 = vpack.c.b16 %v136, %v135
    %v140 = vpack.c.b16 %v138, %v137
    %v143 = vunpack.c.l.b16 %v125
    %v144 = vunpack.c.l.b16 %v126
    %v145 = vpack.c.b16 %v144, %v143
    %vm147 = vcmask 130048
    %v149 = vsel %vm147, %v139, 0
    %v152 = vsel %vm147, %v140, 0
    %154 = vmatprep.subr.bf16.mxu0 0
    %155 = vmatpush1.bf16.msra.mxu0 %v145
    %156 = vmatprep.subr.bf16.mxu0 0
    %157 = vmatpush1.bf16.msra.mxu0 0
    %158 = vmatprep.subr.bf16.mxu0 0
    %159 = vmatpush1.bf16.msra.mxu0 0
    %160 = vmatprep.subr.bf16.mxu0 0
    %161 = vmatpush1.bf16.msra.mxu0 0
    %162 = vmatprep.subr.bf16.mxu0 0
    %163 = vmatpush1.bf16.msra.mxu0 0
    %164 = vmatprep.subr.bf16.mxu0 0
    %165 = vmatpush1.bf16.msra.mxu0 0
    %166 = vmatprep.subr.bf16.mxu0 0
    %167 = vmatpush1.bf16.msra.mxu0 0
    %168 = vmatprep.subr.bf16.mxu0 0
    %169 = vmatpush1.bf16.msra.mxu0 0
    %170 = vmatprep.subr.bf16.mxu0 0
    %171 = vmatpush1.bf16.msra.mxu0 0
    %172 = vmatprep.subr.bf16.mxu0 0
    %173 = vmatpush1.bf16.msra.mxu0 0
    %174 = vmatprep.subr.bf16.mxu0 0
    %175 = vmatpush1.bf16.msra.mxu0 0
    %176 = vmatprep.subr.bf16.mxu0 0
    %177 = vmatpush1.bf16.msra.mxu0 0
    %178 = vmatprep.subr.bf16.mxu0 0
    %179 = vmatpush1.bf16.msra.mxu0 0
    %180 = vmatprep.subr.bf16.mxu0 0
    %181 = vmatpush1.bf16.msra.mxu0 0
    %182 = vmatprep.subr.bf16.mxu0 0
    %183 = vmatpush1.bf16.msra.mxu0 0
    %184 = vmatprep.subr.bf16.mxu0 0
    %185 = vmatpush1.bf16.msra.mxu0 0
    %186 = vmatprep.mubr.bf16.mxu0 0
    %187 = vmatmul.mubr.bf16.gmra.mrb[0].mxu0 %v149
    %v188 = vpop.f32.mrb[0].mxu0
    %v189 = vadd.f32 %v130, %v188
    %v190 = vpop.f32.mrb[0].mxu0
    %v191 = vpop.f32.mrb[0].mxu0
    %v192 = vadd.f32 %v130, %v191
    %v193 = vpop.f32.mrb[0].mxu0
    %194 = vmatprep.mubr.bf16.mxu0 0
    %195 = vmatmul.mubr.bf16.gmra.mrb[0].mxu0 %v152
    %v196 = vpop.f32.mrb[0].mxu0
    %v197 = vadd.f32 %v130, %v196
    %v198 = vpop.f32.mrb[0].mxu0
    %v199 = vpop.f32.mrb[0].mxu0
    %v200 = vadd.f32 %v130, %v199
    %v201 = vpop.f32.mrb[0].mxu0
    %202 = vdwg.mxu0
    %v203 = vld [vmem:[%s4] sm:$0xf]
    %v204 = vld [vmem:[%s4 + $0x4] sm:$0xf]
    %v205 = vlaneseq
    %v206 = vshrl.u32 %v205, 7
    %v207 = vsub.s32 0, %v206
    %v208 = vrot.slane %v47, %v207
    %v211 = vunpack.c.l.b16 %v203
    %v212 = vunpack.c.l.b16 %v204
    %v213 = vpack.c.b16 %v212, %v211
    %215 = vmatprep.subr.bf16.mxu0 0
    %216 = vmatpush1.bf16.msra.mxu0 %v213
    %217 = vmatprep.subr.bf16.mxu0 0
    %218 = vmatpush1.bf16.msra.mxu0 0
    %219 = vmatprep.subr.bf16.mxu0 0
    %220 = vmatpush1.bf16.msra.mxu0 0
    %221 = vmatprep.subr.bf16.mxu0 0
    %222 = vmatpush1.bf16.msra.mxu0 0
    %223 = vmatprep.subr.bf16.mxu0 0
    %224 = vmatpush1.bf16.msra.mxu0 0
    %225 = vmatprep.subr.bf16.mxu0 0
    %226 = vmatpush1.bf16.msra.mxu0 0
    %227 = vmatprep.subr.bf16.mxu0 0
    %228 = vmatpush1.bf16.msra.mxu0 0
    %229 = vmatprep.subr.bf16.mxu0 0
    %230 = vmatpush1.bf16.msra.mxu0 0
    %231 = vmatprep.subr.bf16.mxu0 0
    %232 = vmatpush1.bf16.msra.mxu0 0
    %233 = vmatprep.subr.bf16.mxu0 0
    %234 = vmatpush1.bf16.msra.mxu0 0
    %235 = vmatprep.subr.bf16.mxu0 0
    %236 = vmatpush1.bf16.msra.mxu0 0
    %237 = vmatprep.subr.bf16.mxu0 0
    %238 = vmatpush1.bf16.msra.mxu0 0
    %239 = vmatprep.subr.bf16.mxu0 0
    %240 = vmatpush1.bf16.msra.mxu0 0
    %241 = vmatprep.subr.bf16.mxu0 0
    %242 = vmatpush1.bf16.msra.mxu0 0
    %243 = vmatprep.subr.bf16.mxu0 0
    %244 = vmatpush1.bf16.msra.mxu0 0
    %245 = vmatprep.subr.bf16.mxu0 0
    %246 = vmatpush1.bf16.msra.mxu0 0
    %247 = vmatprep.mubr.bf16.mxu0 0
    %248 = vmatmul.mubr.bf16.gmra.mrb[0].mxu0 %v149
    %v249 = vpop.f32.mrb[0].mxu0
    %v250 = vadd.f32 %v208, %v249
    %v251 = vpop.f32.mrb[0].mxu0
    %v252 = vpop.f32.mrb[0].mxu0
    %v253 = vadd.f32 %v208, %v252
    %v254 = vpop.f32.mrb[0].mxu0
    %255 = vmatprep.mubr.bf16.mxu0 0
    %256 = vmatmul.mubr.bf16.gmra.mrb[0].mxu0 %v152
    %v257 = vpop.f32.mrb[0].mxu0
    %v258 = vadd.f32 %v208, %v257
    %v259 = vpop.f32.mrb[0].mxu0
    %v260 = vpop.f32.mrb[0].mxu0
    %v261 = vadd.f32 %v208, %v260
    %v262 = vpop.f32.mrb[0].mxu0
    %263 = vdwg.mxu0
    %264 = vxpose.xlu0.b32.start [1/16] %v189, 128
    %265 = vxpose.xlu0.b32.cont [2/16] %v192, 128
    %266 = vxpose.xlu0.b32.cont [3/16] %v197, 128
    %267 = vxpose.xlu0.b32.cont [4/16] %v200, 128
    %268 = vxpose.xlu0.b32.cont [5/16] 0.0, 128
    %269 = vxpose.xlu0.b32.cont [6/16] 0.0, 128
    %270 = vxpose.xlu0.b32.cont [7/16] 0.0, 128
    %271 = vxpose.xlu0.b32.cont [8/16] 0.0, 128
    %272 = vxpose.xlu0.b32.cont [9/16] 0.0, 128
    %273 = vxpose.xlu0.b32.cont [10/16] 0.0, 128
    %274 = vxpose.xlu0.b32.cont [11/16] 0.0, 128
    %275 = vxpose.xlu0.b32.cont [12/16] 0.0, 128
    %276 = vxpose.xlu0.b32.cont [13/16] 0.0, 128
    %277 = vxpose.xlu0.b32.cont [14/16] 0.0, 128
    %278 = vxpose.xlu0.b32.cont [15/16] 0.0, 128
    %279 = vxpose.xlu0.b32.end [16/16] 0.0, 128
    %v280 = vpop.trf.xlu0
    %v281 = vpop.trf.xlu0
    %v282 = vpop.trf.xlu0
    %v283 = vpop.trf.xlu0
    %v284 = vpop.trf.xlu0
    %v285 = vpop.trf.xlu0
    %v286 = vpop.trf.xlu0
    %v287 = vpop.trf.xlu0
    %v288 = vpop.trf.xlu0
    %v289 = vpop.trf.xlu0
    %v290 = vpop.trf.xlu0
    %v291 = vpop.trf.xlu0
    %v292 = vpop.trf.xlu0
    %v293 = vpop.trf.xlu0
    %v294 = vpop.trf.xlu0
    %v295 = vpop.trf.xlu0
    %v296 = vpack.c.bf16 %v280, %v280
    %v297 = vpack.c.bf16 %v281, %v281
    %v298 = vpack.c.bf16 %v282, %v282
    %v299 = vpack.c.bf16 %v283, %v283
    %302 = vrot.lane.b32.xlu0 %v119, 120
    %v303 = vpop.permute.xlu0 %302
    %304 = vrot.lane.b32.xlu0 %v122, 120
    %v305 = vpop.permute.xlu0 %304
    %308 = vrot.lane.b32.xlu0 %v119, 112
    %v309 = vpop.permute.xlu0 %308
    %310 = vrot.lane.b32.xlu0 %v122, 112
    %v311 = vpop.permute.xlu0 %310
    %314 = vrot.lane.b32.xlu0 %v119, 104
    %v315 = vpop.permute.xlu0 %314
    %316 = vrot.lane.b32.xlu0 %v122, 104
    %v317 = vpop.permute.xlu0 %316
    %v320 = vpack.c.bf16 %v122, %v119
    %v321 = vpack.c.bf16 %v305, %v303
    %v322 = vpack.c.bf16 %v311, %v309
    %v323 = vpack.c.bf16 %v317, %v315
    %328 = vrot.lane.b32.xlu0 %v250, 120
    %v329 = vpop.permute.xlu0 %328
    %330 = vrot.lane.b32.xlu0 %v253, 120
    %v331 = vpop.permute.xlu0 %330
    %332 = vrot.lane.b32.xlu0 %v258, 120
    %v333 = vpop.permute.xlu0 %332
    %334 = vrot.lane.b32.xlu0 %v261, 120
    %v335 = vpop.permute.xlu0 %334
    %340 = vrot.lane.b32.xlu0 %v250, 112
    %v341 = vpop.permute.xlu0 %340
    %342 = vrot.lane.b32.xlu0 %v253, 112
    %v343 = vpop.permute.xlu0 %342
    %344 = vrot.lane.b32.xlu0 %v258, 112
    %v345 = vpop.permute.xlu0 %344
    %346 = vrot.lane.b32.xlu0 %v261, 112
    %v347 = vpop.permute.xlu0 %346
    %352 = vrot.lane.b32.xlu0 %v250, 104
    %v353 = vpop.permute.xlu0 %352
    %354 = vrot.lane.b32.xlu0 %v253, 104
    %v355 = vpop.permute.xlu0 %354
    %356 = vrot.lane.b32.xlu0 %v258, 104
    %v357 = vpop.permute.xlu0 %356
    %358 = vrot.lane.b32.xlu0 %v261, 104
    %v359 = vpop.permute.xlu0 %358
    %v364 = vpack.c.bf16 %v253, %v250
    %v365 = vpack.c.bf16 %v261, %v258
    %v366 = vpack.c.bf16 %v331, %v329
    %v367 = vpack.c.bf16 %v335, %v333
    %v368 = vpack.c.bf16 %v343, %v341
    %v369 = vpack.c.bf16 %v347, %v345
    %v370 = vpack.c.bf16 %v355, %v353
    %v371 = vpack.c.bf16 %v359, %v357
    %v372 = vlaneseq
    %v373 = vshrl.u32 %v372, 7
    %v374 = vadd.s32 %v373, 8
    %vm375 = vcmp.lt.s32.totalorder %v373, 0
    %v376 = vsub.s32 0, %v373
    %v377 = vsel %vm375, %v376, %v373
    %v378 = vshrl.u32 %v377, 1
    %v379 = vand.u32 %v377, 1
    %v380 = vsub.s32 0, %v379
    %v381 = vsel %vm375, %v380, %v379
    %vm382 = vcmp.lt.s32.totalorder %v374, 0
    %v383 = vsub.s32 0, %v374
    %v384 = vsel %vm382, %v383, %v374
    %v385 = vshrl.u32 %v384, 1
    %v386 = vand.u32 %v384, 1
    %v387 = vsub.s32 0, %v386
    %v388 = vsel %vm382, %v387, %v386
    %vm389 = vcmp.ne.s32.totalorder %v381, 0
    %vm390 = vcmp.ne.s32.totalorder %v388, 0
    %vm391 = vcmp.lt.s32.totalorder %v381, 0
    %vm392 = vcmp.lt.s32.totalorder %v388, 0
    %vm393 = vmand %vm391, %vm389
    %vm394 = vmand %vm392, %vm390
    %v395 = vadd.s32 %v381, 2
    %v396 = vadd.s32 %v388, 2
    %v397 = vsel %vm393, %v395, %v381
    %v398 = vsel %vm394, %v396, %v388
    %v399 = vlaneseq
    %v400 = vand.u32 %v399, 127
    %vm401 = vcmp.lt.s32.totalorder %v400, 0
    %v402 = vsub.s32 0, %v400
    %v403 = vsel %vm401, %v402, %v400
    %v404 = vshrl.u32 %v403, 1
    %v405 = vand.u32 %v403, 1
    %v406 = vsub.s32 0, %v405
    %v407 = vsel %vm401, %v406, %v405
    %vm408 = vcmp.ne.s32.totalorder %v407, 0
    %vm409 = vcmp.lt.s32.totalorder %v407, 0
    %vm410 = vmand %vm409, %vm408
    %v411 = vadd.s32 %v407, 2
    %v412 = vsel %vm410, %v411, %v407
    %vm413 = vcmp.eq.s32.totalorder %v397, %v412
    %vm414 = vcmp.eq.s32.totalorder %v398, %v412
    %v415 = vsel %vm413, 0.0, -1e+30
    %v416 = vsel %vm414, 0.0, -1e+30
    %vm417 = vcmask 64512
    %v419 = vsel %vm417, %v320, 0
    %vm421 = vcmask 1043456
    %v423 = vsel %vm421, %v296, 0
    %425 = vmatprep.subr.bf16.mxu0 0
    %426 = vmatpush1.bf16.msra.mxu0 %v423
    %427 = vmatprep.subr.bf16.mxu0 0
    %428 = vmatpush1.bf16.msra.mxu0 0
    %429 = vmatprep.subr.bf16.mxu0 0
    %430 = vmatpush1.bf16.msra.mxu0 0
    %431 = vmatprep.subr.bf16.mxu0 0
    %432 = vmatpush1.bf16.msra.mxu0 0
    %433 = vmatprep.subr.bf16.mxu0 0
    %434 = vmatpush1.bf16.msra.mxu0 0
    %435 = vmatprep.subr.bf16.mxu0 0
    %436 = vmatpush1.bf16.msra.mxu0 0
    %437 = vmatprep.subr.bf16.mxu0 0
    %438 = vmatpush1.bf16.msra.mxu0 0
    %439 = vmatprep.subr.bf16.mxu0 0
    %440 = vmatpush1.bf16.msra.mxu0 0
    %441 = vmatprep.subr.bf16.mxu0 0
    %442 = vmatpush1.bf16.msra.mxu0 0
    %443 = vmatprep.subr.bf16.mxu0 0
    %444 = vmatpush1.bf16.msra.mxu0 0
    %445 = vmatprep.subr.bf16.mxu0 0
    %446 = vmatpush1.bf16.msra.mxu0 0
    %447 = vmatprep.subr.bf16.mxu0 0
    %448 = vmatpush1.bf16.msra.mxu0 0
    %449 = vmatprep.subr.bf16.mxu0 0
    %450 = vmatpush1.bf16.msra.mxu0 0
    %451 = vmatprep.subr.bf16.mxu0 0
    %452 = vmatpush1.bf16.msra.mxu0 0
    %453 = vmatprep.subr.bf16.mxu0 0
    %454 = vmatpush1.bf16.msra.mxu0 0
    %455 = vmatprep.subr.bf16.mxu0 0
    %456 = vmatpush1.bf16.msra.mxu0 0
    %457 = vmatprep.mubr.bf16.mxu0 0
    %458 = vmatmul.mubr.bf16.gmra.mrb[0].mxu0 %v419
    %v459 = vpop.f32.mrb[0].mxu0
    %v460 = vadd.f32 %v415, %v459
    %v461 = vpop.f32.mrb[0].mxu0
    %v462 = vpop.f32.mrb[0].mxu0
    %v463 = vadd.f32 %v416, %v462
    %v464 = vpop.f32.mrb[0].mxu0
    %465 = vdwg.mxu0
    %v467 = vsel %vm417, %v321, 0
    %v470 = vsel %vm421, %v297, 0
    %472 = vmatprep.subr.bf16.mxu0 0
    %473 = vmatpush1.bf16.msra.mxu0 %v470
    %474 = vmatprep.subr.bf16.mxu0 0
    %475 = vmatpush1.bf16.msra.mxu0 0
    %476 = vmatprep.subr.bf16.mxu0 0
    %477 = vmatpush1.bf16.msra.mxu0 0
    %478 = vmatprep.subr.bf16.mxu0 0
    %479 = vmatpush1.bf16.msra.mxu0 0
    %480 = vmatprep.subr.bf16.mxu0 0
    %481 = vmatpush1.bf16.msra.mxu0 0
    %482 = vmatprep.subr.bf16.mxu0 0
    %483 = vmatpush1.bf16.msra.mxu0 0
    %484 = vmatprep.subr.bf16.mxu0 0
    %485 = vmatpush1.bf16.msra.mxu0 0
    %486 = vmatprep.subr.bf16.mxu0 0
    %487 = vmatpush1.bf16.msra.mxu0 0
    %488 = vmatprep.subr.bf16.mxu0 0
    %489 = vmatpush1.bf16.msra.mxu0 0
    %490 = vmatprep.subr.bf16.mxu0 0
    %491 = vmatpush1.bf16.msra.mxu0 0
    %492 = vmatprep.subr.bf16.mxu0 0
    %493 = vmatpush1.bf16.msra.mxu0 0
    %494 = vmatprep.subr.bf16.mxu0 0
    %495 = vmatpush1.bf16.msra.mxu0 0
    %496 = vmatprep.subr.bf16.mxu0 0
    %497 = vmatpush1.bf16.msra.mxu0 0
    %498 = vmatprep.subr.bf16.mxu0 0
    %499 = vmatpush1.bf16.msra.mxu0 0
    %500 = vmatprep.subr.bf16.mxu0 0
    %501 = vmatpush1.bf16.msra.mxu0 0
    %502 = vmatprep.subr.bf16.mxu0 0
    %503 = vmatpush1.bf16.msra.mxu0 0
    %504 = vmatprep.mubr.bf16.mxu0 0
    %505 = vmatmul.mubr.bf16.gmra.mrb[0].mxu0 %v467
    %v506 = vpop.f32.mrb[0].mxu0
    %v507 = vadd.f32 %v415, %v506
    %v508 = vpop.f32.mrb[0].mxu0
    %v509 = vpop.f32.mrb[0].mxu0
    %v510 = vadd.f32 %v416, %v509
    %v511 = vpop.f32.mrb[0].mxu0
    %512 = vdwg.mxu0
    %v514 = vsel %vm417, %v322, 0
    %v517 = vsel %vm421, %v298, 0
    %519 = vmatprep.subr.bf16.mxu0 0
    %520 = vmatpush1.bf16.msra.mxu0 %v517
    %521 = vmatprep.subr.bf16.mxu0 0
    %522 = vmatpush1.bf16.msra.mxu0 0
    %523 = vmatprep.subr.bf16.mxu0 0
    %524 = vmatpush1.bf16.msra.mxu0 0
    %525 = vmatprep.subr.bf16.mxu0 0
    %526 = vmatpush1.bf16.msra.mxu0 0
    %527 = vmatprep.subr.bf16.mxu0 0
    %528 = vmatpush1.bf16.msra.mxu0 0
    %529 = vmatprep.subr.bf16.mxu0 0
    %530 = vmatpush1.bf16.msra.mxu0 0
    %531 = vmatprep.subr.bf16.mxu0 0
    %532 = vmatpush1.bf16.msra.mxu0 0
    %533 = vmatprep.subr.bf16.mxu0 0
    %534 = vmatpush1.bf16.msra.mxu0 0
    %535 = vmatprep.subr.bf16.mxu0 0
    %536 = vmatpush1.bf16.msra.mxu0 0
    %537 = vmatprep.subr.bf16.mxu0 0
    %538 = vmatpush1.bf16.msra.mxu0 0
    %539 = vmatprep.subr.bf16.mxu0 0
    %540 = vmatpush1.bf16.msra.mxu0 0
    %541 = vmatprep.subr.bf16.mxu0 0
    %542 = vmatpush1.bf16.msra.mxu0 0
    %543 = vmatprep.subr.bf16.mxu0 0
    %544 = vmatpush1.bf16.msra.mxu0 0
    %545 = vmatprep.subr.bf16.mxu0 0
    %546 = vmatpush1.bf16.msra.mxu0 0
    %547 = vmatprep.subr.bf16.mxu0 0
    %548 = vmatpush1.bf16.msra.mxu0 0
    %549 = vmatprep.subr.bf16.mxu0 0
    %550 = vmatpush1.bf16.msra.mxu0 0
    %551 = vmatprep.mubr.bf16.mxu0 0
    %552 = vmatmul.mubr.bf16.gmra.mrb[0].mxu0 %v514
    %v553 = vpop.f32.mrb[0].mxu0
    %v554 = vadd.f32 %v415, %v553
    %v555 = vpop.f32.mrb[0].mxu0
    %v556 = vpop.f32.mrb[0].mxu0
    %v557 = vadd.f32 %v416, %v556
    %v558 = vpop.f32.mrb[0].mxu0
    %559 = vdwg.mxu0
    %v561 = vsel %vm417, %v323, 0
    %v564 = vsel %vm421, %v299, 0
    %566 = vmatprep.subr.bf16.mxu0 0
    %567 = vmatpush1.bf16.msra.mxu0 %v564
    %568 = vmatprep.subr.bf16.mxu0 0
    %569 = vmatpush1.bf16.msra.mxu0 0
    %570 = vmatprep.subr.bf16.mxu0 0
    %571 = vmatpush1.bf16.msra.mxu0 0
    %572 = vmatprep.subr.bf16.mxu0 0
    %573 = vmatpush1.bf16.msra.mxu0 0
    %574 = vmatprep.subr.bf16.mxu0 0
    %575 = vmatpush1.bf16.msra.mxu0 0
    %576 = vmatprep.subr.bf16.mxu0 0
    %577 = vmatpush1.bf16.msra.mxu0 0
    %578 = vmatprep.subr.bf16.mxu0 0
    %579 = vmatpush1.bf16.msra.mxu0 0
    %580 = vmatprep.subr.bf16.mxu0 0
    %581 = vmatpush1.bf16.msra.mxu0 0
    %582 = vmatprep.subr.bf16.mxu0 0
    %583 = vmatpush1.bf16.msra.mxu0 0
    %584 = vmatprep.subr.bf16.mxu0 0
    %585 = vmatpush1.bf16.msra.mxu0 0
    %586 = vmatprep.subr.bf16.mxu0 0
    %587 = vmatpush1.bf16.msra.mxu0 0
    %588 = vmatprep.subr.bf16.mxu0 0
    %589 = vmatpush1.bf16.msra.mxu0 0
    %590 = vmatprep.subr.bf16.mxu0 0
    %591 = vmatpush1.bf16.msra.mxu0 0
    %592 = vmatprep.subr.bf16.mxu0 0
    %593 = vmatpush1.bf16.msra.mxu0 0
    %594 = vmatprep.subr.bf16.mxu0 0
    %595 = vmatpush1.bf16.msra.mxu0 0
    %596 = vmatprep.subr.bf16.mxu0 0
    %597 = vmatpush1.bf16.msra.mxu0 0
    %598 = vmatprep.mubr.bf16.mxu0 0
    %599 = vmatmul.mubr.bf16.gmra.mrb[0].mxu0 %v561
    %v600 = vpop.f32.mrb[0].mxu0
    %v601 = vadd.f32 %v415, %v600
    %v602 = vpop.f32.mrb[0].mxu0
    %v603 = vpop.f32.mrb[0].mxu0
    %v604 = vadd.f32 %v416, %v603
    %v605 = vpop.f32.mrb[0].mxu0
    %606 = vdwg.mxu0
    %v607 = vsel %vm80, %v460, -inf
    %608 = vmax.xlane.f32.xlu0 %v607
    %v609 = vpop.xlane.xlu0 %608
    %v610 = vsel %vm80, %v463, -inf
    %611 = vmax.xlane.f32.xlu0 %v610
    %v612 = vpop.xlane.xlu0 %611
    %v613 = vsel %vm80, %v507, -inf
    %614 = vmax.xlane.f32.xlu0 %v613
    %v615 = vpop.xlane.xlu0 %614
    %v616 = vsel %vm80, %v510, -inf
    %617 = vmax.xlane.f32.xlu0 %v616
    %v618 = vpop.xlane.xlu0 %617
    %v619 = vsel %vm80, %v554, -inf
    %620 = vmax.xlane.f32.xlu0 %v619
    %v621 = vpop.xlane.xlu0 %620
    %v622 = vsel %vm80, %v557, -inf
    %623 = vmax.xlane.f32.xlu0 %v622
    %v624 = vpop.xlane.xlu0 %623
    %v625 = vsel %vm80, %v601, -inf
    %626 = vmax.xlane.f32.xlu0 %v625
    %v627 = vpop.xlane.xlu0 %626
    %v628 = vsel %vm80, %v604, -inf
    %629 = vmax.xlane.f32.xlu0 %v628
    %v630 = vpop.xlane.xlu0 %629
    %v631 = vsub.f32 %v460, %v609
    %v632 = vsub.f32 %v463, %v612
    %v633 = vsub.f32 %v507, %v615
    %v634 = vsub.f32 %v510, %v618
    %v635 = vsub.f32 %v554, %v621
    %v636 = vsub.f32 %v557, %v624
    %v637 = vsub.f32 %v601, %v627
    %v638 = vsub.f32 %v604, %v630
    %v639 = vmul.f32 %v631, 1.442695
    %v640 = vpow.pop %v639
    %v641 = vmul.f32 %v632, 1.442695
    %v642 = vpow.pop %v641
    %v643 = vmul.f32 %v633, 1.442695
    %v644 = vpow.pop %v643
    %v645 = vmul.f32 %v634, 1.442695
    %v646 = vpow.pop %v645
    %v647 = vmul.f32 %v635, 1.442695
    %v648 = vpow.pop %v647
    %v649 = vmul.f32 %v636, 1.442695
    %v650 = vpow.pop %v649
    %v651 = vmul.f32 %v637, 1.442695
    %v652 = vpow.pop %v651
    %v653 = vmul.f32 %v638, 1.442695
    %v654 = vpow.pop %v653
    %v655 = vsel %vm80, %v640, 0.0
    %656 = vadd.xlane.f32.xlu0 %v655
    %v657 = vpop.xlane.xlu0 %656
    %v658 = vsel %vm80, %v642, 0.0
    %659 = vadd.xlane.f32.xlu0 %v658
    %v660 = vpop.xlane.xlu0 %659
    %v661 = vsel %vm80, %v644, 0.0
    %662 = vadd.xlane.f32.xlu0 %v661
    %v663 = vpop.xlane.xlu0 %662
    %v664 = vsel %vm80, %v646, 0.0
    %665 = vadd.xlane.f32.xlu0 %v664
    %v666 = vpop.xlane.xlu0 %665
    %v667 = vsel %vm80, %v648, 0.0
    %668 = vadd.xlane.f32.xlu0 %v667
    %v669 = vpop.xlane.xlu0 %668
    %v670 = vsel %vm80, %v650, 0.0
    %671 = vadd.xlane.f32.xlu0 %v670
    %v672 = vpop.xlane.xlu0 %671
    %v673 = vsel %vm80, %v652, 0.0
    %674 = vadd.xlane.f32.xlu0 %v673
    %v675 = vpop.xlane.xlu0 %674
    %v676 = vsel %vm80, %v654, 0.0
    %677 = vadd.xlane.f32.xlu0 %v676
    %v678 = vpop.xlane.xlu0 %677
    %v679 = vrcp.pop %v657
    %v680 = vmul.f32 %v640, %v679
    %v681 = vrcp.pop %v660
    %v682 = vmul.f32 %v642, %v681
    %v683 = vrcp.pop %v663
    %v684 = vmul.f32 %v644, %v683
    %v685 = vrcp.pop %v666
    %v686 = vmul.f32 %v646, %v685
    %v687 = vrcp.pop %v669
    %v688 = vmul.f32 %v648, %v687
    %v689 = vrcp.pop %v672
    %v690 = vmul.f32 %v650, %v689
    %v691 = vrcp.pop %v675
    %v692 = vmul.f32 %v652, %v691
    %v693 = vrcp.pop %v678
    %v694 = vmul.f32 %v654, %v693
    %v695 = vpack.c.bf16 %v682, %v680
    %v696 = vpack.c.bf16 %v686, %v684
    %v697 = vpack.c.bf16 %v690, %v688
    %v698 = vpack.c.bf16 %v694, %v692
    %v700 = vsel %vm80, %v695, 0
    %702 = vmatprep.subr.bf16.mxu0 0
    %703 = vmatpush1.bf16.msra.mxu0 %v364
    %704 = vmatprep.subr.bf16.mxu0 0
    %705 = vmatpush1.bf16.msra.mxu0 %v365
    %706 = vmatprep.subr.bf16.mxu0 0
    %707 = vmatpush1.bf16.msra.mxu0 0
    %708 = vmatprep.subr.bf16.mxu0 0
    %709 = vmatpush1.bf16.msra.mxu0 0
    %710 = vmatprep.subr.bf16.mxu0 0
    %711 = vmatpush1.bf16.msra.mxu0 0
    %712 = vmatprep.subr.bf16.mxu0 0
    %713 = vmatpush1.bf16.msra.mxu0 0
    %714 = vmatprep.subr.bf16.mxu0 0
    %715 = vmatpush1.bf16.msra.mxu0 0
    %716 = vmatprep.subr.bf16.mxu0 0
    %717 = vmatpush1.bf16.msra.mxu0 0
    %718 = vmatprep.subr.bf16.mxu0 0
    %719 = vmatpush1.bf16.msra.mxu0 0
    %720 = vmatprep.subr.bf16.mxu0 0
    %721 = vmatpush1.bf16.msra.mxu0 0
    %722 = vmatprep.subr.bf16.mxu0 0
    %723 = vmatpush1.bf16.msra.mxu0 0
    %724 = vmatprep.subr.bf16.mxu0 0
    %725 = vmatpush1.bf16.msra.mxu0 0
    %726 = vmatprep.subr.bf16.mxu0 0
    %727 = vmatpush1.bf16.msra.mxu0 0
    %728 = vmatprep.subr.bf16.mxu0 0
    %729 = vmatpush1.bf16.msra.mxu0 0
    %730 = vmatprep.subr.bf16.mxu0 0
    %731 = vmatpush1.bf16.msra.mxu0 0
    %732 = vmatprep.subr.bf16.mxu0 0
    %733 = vmatpush1.bf16.msra.mxu0 0
    %734 = vmatprep.mubr.bf16.mxu0 0
    %735 = vmatmul.mubr.bf16.gmra.mrb[0].mxu0 %v700
    %v736 = vpop.f32.mrb[0].mxu0
    %v737 = vadd.f32 0.0, %v736
    %v738 = vpop.f32.mrb[0].mxu0
    %v739 = vpop.f32.mrb[0].mxu0
    %v740 = vadd.f32 0.0, %v739
    %v741 = vpop.f32.mrb[0].mxu0
    %742 = vdwg.mxu0
    %v744 = vsel %vm80, %v696, 0
    %746 = vmatprep.subr.bf16.mxu0 0
    %747 = vmatpush1.bf16.msra.mxu0 %v366
    %748 = vmatprep.subr.bf16.mxu0 0
    %749 = vmatpush1.bf16.msra.mxu0 %v367
    %750 = vmatprep.subr.bf16.mxu0 0
    %751 = vmatpush1.bf16.msra.mxu0 0
    %752 = vmatprep.subr.bf16.mxu0 0
    %753 = vmatpush1.bf16.msra.mxu0 0
    %754 = vmatprep.subr.bf16.mxu0 0
    %755 = vmatpush1.bf16.msra.mxu0 0
    %756 = vmatprep.subr.bf16.mxu0 0
    %757 = vmatpush1.bf16.msra.mxu0 0
    %758 = vmatprep.subr.bf16.mxu0 0
    %759 = vmatpush1.bf16.msra.mxu0 0
    %760 = vmatprep.subr.bf16.mxu0 0
    %761 = vmatpush1.bf16.msra.mxu0 0
    %762 = vmatprep.subr.bf16.mxu0 0
    %763 = vmatpush1.bf16.msra.mxu0 0
    %764 = vmatprep.subr.bf16.mxu0 0
    %765 = vmatpush1.bf16.msra.mxu0 0
    %766 = vmatprep.subr.bf16.mxu0 0
    %767 = vmatpush1.bf16.msra.mxu0 0
    %768 = vmatprep.subr.bf16.mxu0 0
    %769 = vmatpush1.bf16.msra.mxu0 0
    %770 = vmatprep.subr.bf16.mxu0 0
    %771 = vmatpush1.bf16.msra.mxu0 0
    %772 = vmatprep.subr.bf16.mxu0 0
    %773 = vmatpush1.bf16.msra.mxu0 0
    %774 = vmatprep.subr.bf16.mxu0 0
    %775 = vmatpush1.bf16.msra.mxu0 0
    %776 = vmatprep.subr.bf16.mxu0 0
    %777 = vmatpush1.bf16.msra.mxu0 0
    %778 = vmatprep.mubr.bf16.mxu0 0
    %779 = vmatmul.mubr.bf16.gmra.mrb[0].mxu0 %v744
    %v780 = vpop.f32.mrb[0].mxu0
    %v781 = vadd.f32 0.0, %v780
    %v782 = vpop.f32.mrb[0].mxu0
    %v783 = vpop.f32.mrb[0].mxu0
    %v784 = vadd.f32 0.0, %v783
    %v785 = vpop.f32.mrb[0].mxu0
    %786 = vdwg.mxu0
    %v788 = vsel %vm80, %v697, 0
    %790 = vmatprep.subr.bf16.mxu0 0
    %791 = vmatpush1.bf16.msra.mxu0 %v368
    %792 = vmatprep.subr.bf16.mxu0 0
    %793 = vmatpush1.bf16.msra.mxu0 %v369
    %794 = vmatprep.subr.bf16.mxu0 0
    %795 = vmatpush1.bf16.msra.mxu0 0
    %796 = vmatprep.subr.bf16.mxu0 0
    %797 = vmatpush1.bf16.msra.mxu0 0
    %798 = vmatprep.subr.bf16.mxu0 0
    %799 = vmatpush1.bf16.msra.mxu0 0
    %800 = vmatprep.subr.bf16.mxu0 0
    %801 = vmatpush1.bf16.msra.mxu0 0
    %802 = vmatprep.subr.bf16.mxu0 0
    %803 = vmatpush1.bf16.msra.mxu0 0
    %804 = vmatprep.subr.bf16.mxu0 0
    %805 = vmatpush1.bf16.msra.mxu0 0
    %806 = vmatprep.subr.bf16.mxu0 0
    %807 = vmatpush1.bf16.msra.mxu0 0
    %808 = vmatprep.subr.bf16.mxu0 0
    %809 = vmatpush1.bf16.msra.mxu0 0
    %810 = vmatprep.subr.bf16.mxu0 0
    %811 = vmatpush1.bf16.msra.mxu0 0
    %812 = vmatprep.subr.bf16.mxu0 0
    %813 = vmatpush1.bf16.msra.mxu0 0
    %814 = vmatprep.subr.bf16.mxu0 0
    %815 = vmatpush1.bf16.msra.mxu0 0
    %816 = vmatprep.subr.bf16.mxu0 0
    %817 = vmatpush1.bf16.msra.mxu0 0
    %818 = vmatprep.subr.bf16.mxu0 0
    %819 = vmatpush1.bf16.msra.mxu0 0
    %820 = vmatprep.subr.bf16.mxu0 0
    %821 = vmatpush1.bf16.msra.mxu0 0
    %822 = vmatprep.mubr.bf16.mxu0 0
    %823 = vmatmul.mubr.bf16.gmra.mrb[0].mxu0 %v788
    %v824 = vpop.f32.mrb[0].mxu0
    %v825 = vadd.f32 0.0, %v824
    %v826 = vpop.f32.mrb[0].mxu0
    %v827 = vpop.f32.mrb[0].mxu0
    %v828 = vadd.f32 0.0, %v827
    %v829 = vpop.f32.mrb[0].mxu0
    %830 = vdwg.mxu0
    %v832 = vsel %vm80, %v698, 0
    %834 = vmatprep.subr.bf16.mxu0 0
    %835 = vmatpush1.bf16.msra.mxu0 %v370
    %836 = vmatprep.subr.bf16.mxu0 0
    %837 = vmatpush1.bf16.msra.mxu0 %v371
    %838 = vmatprep.subr.bf16.mxu0 0
    %839 = vmatpush1.bf16.msra.mxu0 0
    %840 = vmatprep.subr.bf16.mxu0 0
    %841 = vmatpush1.bf16.msra.mxu0 0
    %842 = vmatprep.subr.bf16.mxu0 0
    %843 = vmatpush1.bf16.msra.mxu0 0
    %844 = vmatprep.subr.bf16.mxu0 0
    %845 = vmatpush1.bf16.msra.mxu0 0
    %846 = vmatprep.subr.bf16.mxu0 0
    %847 = vmatpush1.bf16.msra.mxu0 0
    %848 = vmatprep.subr.bf16.mxu0 0
    %849 = vmatpush1.bf16.msra.mxu0 0
    %850 = vmatprep.subr.bf16.mxu0 0
    %851 = vmatpush1.bf16.msra.mxu0 0
    %852 = vmatprep.subr.bf16.mxu0 0
    %853 = vmatpush1.bf16.msra.mxu0 0
    %854 = vmatprep.subr.bf16.mxu0 0
    %855 = vmatpush1.bf16.msra.mxu0 0
    %856 = vmatprep.subr.bf16.mxu0 0
    %857 = vmatpush1.bf16.msra.mxu0 0
    %858 = vmatprep.subr.bf16.mxu0 0
    %859 = vmatpush1.bf16.msra.mxu0 0
    %860 = vmatprep.subr.bf16.mxu0 0
    %861 = vmatpush1.bf16.msra.mxu0 0
    %862 = vmatprep.subr.bf16.mxu0 0
    %863 = vmatpush1.bf16.msra.mxu0 0
    %864 = vmatprep.subr.bf16.mxu0 0
    %865 = vmatpush1.bf16.msra.mxu0 0
    %866 = vmatprep.mubr.bf16.mxu0 0
    %867 = vmatmul.mubr.bf16.gmra.mrb[0].mxu0 %v832
    %v868 = vpop.f32.mrb[0].mxu0
    %v869 = vadd.f32 0.0, %v868
    %v870 = vpop.f32.mrb[0].mxu0
    %v871 = vpop.f32.mrb[0].mxu0
    %v872 = vadd.f32 0.0, %v871
    %v873 = vpop.f32.mrb[0].mxu0
    %874 = vdwg.mxu0
    %877 = vrot.lane.b32.xlu0 %v781, 8
    %v878 = vpop.permute.xlu0 %877
    %879 = vrot.lane.b32.xlu0 %v784, 8
    %v880 = vpop.permute.xlu0 %879
    %885 = vrot.lane.b32.xlu0 %v825, 16
    %v886 = vpop.permute.xlu0 %885
    %887 = vrot.lane.b32.xlu0 %v828, 16
    %v888 = vpop.permute.xlu0 %887
    %893 = vrot.lane.b32.xlu0 %v869, 24
    %v894 = vpop.permute.xlu0 %893
    %895 = vrot.lane.b32.xlu0 %v872, 24
    %v896 = vpop.permute.xlu0 %895
    %v899 = vsel %vm417, %v737, %v878
    %v900 = vsel %vm417, %v740, %v880
    %v901 = vsel %vm147, %v899, %v886
    %v902 = vsel %vm147, %v900, %v888
    %vm903 = vcmask 195584
    %v904 = vsel %vm903, %v901, %v894
    %v905 = vsel %vm903, %v902, %v896
    %v906 = vpack.c.bf16 %v905, %v904
    %v907 = vld [vmem:[%s5] sm:$0xf]
    %v908 = vld [vmem:[%s5 + $0x4] sm:$0xf]
    %v909 = vld [vmem:[%s5 + $0x8] sm:$0xf]
    %v910 = vld [vmem:[%s5 + $0xc] sm:$0xf]
    %v911 = vlaneseq
    %v912 = vshrl.u32 %v911, 7
    %v913 = vsub.s32 0, %v912
    %v914 = vrot.slane %v48, %v913
    %v919 = vunpack.c.l.b16 %v907
    %v920 = vunpack.c.l.b16 %v908
    %v921 = vunpack.c.l.b16 %v909
    %v922 = vunpack.c.l.b16 %v910
    %v923 = vpack.c.b16 %v920, %v919
    %v924 = vpack.c.b16 %v922, %v921
    %v928 = vsel %vm80, %v906, 0
    %930 = vmatprep.subr.bf16.mxu0 0
    %931 = vmatpush1.bf16.msra.mxu0 %v923
    %932 = vmatprep.subr.bf16.mxu0 0
    %933 = vmatpush1.bf16.msra.mxu0 %v924
    %934 = vmatprep.subr.bf16.mxu0 0
    %935 = vmatpush1.bf16.msra.mxu0 0
    %936 = vmatprep.subr.bf16.mxu0 0
    %937 = vmatpush1.bf16.msra.mxu0 0
    %938 = vmatprep.subr.bf16.mxu0 0
    %939 = vmatpush1.bf16.msra.mxu0 0
    %940 = vmatprep.subr.bf16.mxu0 0
    %941 = vmatpush1.bf16.msra.mxu0 0
    %942 = vmatprep.subr.bf16.mxu0 0
    %943 = vmatpush1.bf16.msra.mxu0 0
    %944 = vmatprep.subr.bf16.mxu0 0
    %945 = vmatpush1.bf16.msra.mxu0 0
    %946 = vmatprep.subr.bf16.mxu0 0
    %947 = vmatpush1.bf16.msra.mxu0 0
    %948 = vmatprep.subr.bf16.mxu0 0
    %949 = vmatpush1.bf16.msra.mxu0 0
    %950 = vmatprep.subr.bf16.mxu0 0
    %951 = vmatpush1.bf16.msra.mxu0 0
    %952 = vmatprep.subr.bf16.mxu0 0
    %953 = vmatpush1.bf16.msra.mxu0 0
    %954 = vmatprep.subr.bf16.mxu0 0
    %955 = vmatpush1.bf16.msra.mxu0 0
    %956 = vmatprep.subr.bf16.mxu0 0
    %957 = vmatpush1.bf16.msra.mxu0 0
    %958 = vmatprep.subr.bf16.mxu0 0
    %959 = vmatpush1.bf16.msra.mxu0 0
    %960 = vmatprep.subr.bf16.mxu0 0
    %961 = vmatpush1.bf16.msra.mxu0 0
    %962 = vmatprep.mubr.bf16.mxu0 0
    %963 = vmatmul.mubr.bf16.gmra.mrb[0].mxu0 %v928
    %v964 = vpop.f32.mrb[0].mxu0
    %v965 = vadd.f32 %v914, %v964
    %v966 = vpop.f32.mrb[0].mxu0
    %v967 = vpop.f32.mrb[0].mxu0
    %v968 = vadd.f32 %v914, %v967
    %v969 = vpop.f32.mrb[0].mxu0
    %970 = vdwg.mxu0
    %v971 = vadd.f32 %v43, %v965
    %v972 = vadd.f32 %v44, %v968
    %v973 = vsel %vm80, %v971, 0.0
    %974 = vadd.xlane.f32.xlu0 %v973
    %v975 = vpop.xlane.xlu0 %974
    %v976 = vsel %vm80, %v972, 0.0
    %977 = vadd.xlane.f32.xlu0 %v976
    %v978 = vpop.xlane.xlu0 %977
    %v979 = vrcp.pop 32.0
    %v980 = vmul.f32 %v975, %v979
    %v981 = vmul.f32 %v978, %v979
    %v982 = vsub.f32 %v971, %v980
    %v983 = vsub.f32 %v972, %v981
    %v984 = vmul.f32 %v982, %v982
    %v985 = vmul.f32 %v983, %v983
    %v986 = vsel %vm80, %v984, 0.0
    %987 = vadd.xlane.f32.xlu0 %v986
    %v988 = vpop.xlane.xlu0 %987
    %v989 = vsel %vm80, %v985, 0.0
    %990 = vadd.xlane.f32.xlu0 %v989
    %v991 = vpop.xlane.xlu0 %990
    %v992 = vmul.f32 %v988, %v979
    %v993 = vmul.f32 %v991, %v979
    %v994 = vadd.f32 %v992, 1e-05
    %v995 = vadd.f32 %v993, 1e-05
    %v996 = vrsqrt.pop %v994
    %v997 = vrsqrt.pop %v995
    %v998 = vmul.f32 %v982, %v996
    %v999 = vmul.f32 %v983, %v997
    %v1000 = vlaneseq
    %v1001 = vshrl.u32 %v1000, 7
    %v1002 = vsub.s32 0, %v1001
    %v1003 = vrot.slane %v49, %v1002
    %v1004 = vmul.f32 %v998, %v1003
    %v1005 = vmul.f32 %v999, %v1003
    %v1006 = vlaneseq
    %v1007 = vshrl.u32 %v1006, 7
    %v1008 = vsub.s32 0, %v1007
    %v1009 = vrot.slane %v50, %v1008
    %v1010 = vadd.f32 %v1004, %v1009
    %v1011 = vadd.f32 %v1005, %v1009
    %v1012 = vpack.c.bf16 %v1011, %v1010
    %v1013 = vld [vmem:[%s6] sm:$0xf]
    %v1014 = vld [vmem:[%s6 + $0x4] sm:$0xf]
    %v1015 = vld [vmem:[%s6 + $0x8] sm:$0xf]
    %v1016 = vld [vmem:[%s6 + $0xc] sm:$0xf]
    %v1018 = vlaneseq
    %v1019 = vshrl.u32 %v1018, 7
    %v1020 = vsub.s32 0, %v1019
    %v1021 = vrot.slane %v54, %v1020
    %v1027 = vunpack.c.l.b16 %v1013
    %v1028 = vunpack.c.l.b16 %v1014
    %v1029 = vunpack.c.l.b16 %v1015
    %v1030 = vunpack.c.l.b16 %v1016
    %v1031 = vpack.c.b16 %v1028, %v1027
    %v1032 = vpack.c.b16 %v1030, %v1029
    %v1036 = vsel %vm80, %v1012, 0
    %1038 = vmatprep.subr.bf16.mxu0 0
    %1039 = vmatpush1.bf16.msra.mxu0 %v1031
    %1040 = vmatprep.subr.bf16.mxu0 0
    %1041 = vmatpush1.bf16.msra.mxu0 %v1032
    %1042 = vmatprep.subr.bf16.mxu0 0
    %1043 = vmatpush1.bf16.msra.mxu0 0
    %1044 = vmatprep.subr.bf16.mxu0 0
    %1045 = vmatpush1.bf16.msra.mxu0 0
    %1046 = vmatprep.subr.bf16.mxu0 0
    %1047 = vmatpush1.bf16.msra.mxu0 0
    %1048 = vmatprep.subr.bf16.mxu0 0
    %1049 = vmatpush1.bf16.msra.mxu0 0
    %1050 = vmatprep.subr.bf16.mxu0 0
    %1051 = vmatpush1.bf16.msra.mxu0 0
    %1052 = vmatprep.subr.bf16.mxu0 0
    %1053 = vmatpush1.bf16.msra.mxu0 0
    %1054 = vmatprep.subr.bf16.mxu0 0
    %1055 = vmatpush1.bf16.msra.mxu0 0
    %1056 = vmatprep.subr.bf16.mxu0 0
    %1057 = vmatpush1.bf16.msra.mxu0 0
    %1058 = vmatprep.subr.bf16.mxu0 0
    %1059 = vmatpush1.bf16.msra.mxu0 0
    %1060 = vmatprep.subr.bf16.mxu0 0
    %1061 = vmatpush1.bf16.msra.mxu0 0
    %1062 = vmatprep.subr.bf16.mxu0 0
    %1063 = vmatpush1.bf16.msra.mxu0 0
    %1064 = vmatprep.subr.bf16.mxu0 0
    %1065 = vmatpush1.bf16.msra.mxu0 0
    %1066 = vmatprep.subr.bf16.mxu0 0
    %1067 = vmatpush1.bf16.msra.mxu0 0
    %1068 = vmatprep.subr.bf16.mxu0 0
    %1069 = vmatpush1.bf16.msra.mxu0 0
    %1070 = vmatprep.mubr.bf16.mxu0 0
    %1071 = vmatmul.mubr.bf16.gmra.mrb[0].mxu0 %v1036
    %v1072 = vpop.f32.mrb[0].mxu0
    %v1073 = vadd.f32 %v1021, %v1072
    %v1074 = vpop.f32.mrb[0].mxu0
    %v1075 = vpop.f32.mrb[0].mxu0
    %v1076 = vadd.f32 %v1021, %v1075
    %v1077 = vpop.f32.mrb[0].mxu0
    %1078 = vdwg.mxu0
    %v1079 = vmax.f32 %v1073, 0.0
    %v1080 = vmax.f32 %v1076, 0.0
    %v1081 = vpack.c.bf16 %v1080, %v1079
    %v1082 = vld [vmem:[%s7] sm:$0xf]
    %v1083 = vld [vmem:[%s7 + $0x4] sm:$0xf]
    %v1084 = vld [vmem:[%s7 + $0x8] sm:$0xf]
    %v1085 = vld [vmem:[%s7 + $0xc] sm:$0xf]
    %v1086 = vld [vmem:[%s7 + $0x10] sm:$0xf]
    %v1087 = vld [vmem:[%s7 + $0x14] sm:$0xf]
    %v1088 = vld [vmem:[%s7 + $0x18] sm:$0xf]
    %v1089 = vld [vmem:[%s7 + $0x1c] sm:$0xf]
    %v1090 = vld [vmem:[%s7 + $0x20] sm:$0xf]
    %v1091 = vld [vmem:[%s7 + $0x24] sm:$0xf]
    %v1092 = vld [vmem:[%s7 + $0x28] sm:$0xf]
    %v1093 = vld [vmem:[%s7 + $0x2c] sm:$0xf]
    %v1094 = vld [vmem:[%s7 + $0x30] sm:$0xf]
    %v1095 = vld [vmem:[%s7 + $0x34] sm:$0xf]
    %v1096 = vld [vmem:[%s7 + $0x38] sm:$0xf]
    %v1097 = vld [vmem:[%s7 + $0x3c] sm:$0xf]
    %v1098 = vlaneseq
    %v1099 = vshrl.u32 %v1098, 7
    %v1100 = vsub.s32 0, %v1099
    %v1101 = vrot.slane %v51, %v1100
    %v1118 = vunpack.c.l.b16 %v1082
    %v1119 = vunpack.c.l.b16 %v1083
    %v1120 = vunpack.c.l.b16 %v1084
    %v1121 = vunpack.c.l.b16 %v1085
    %v1122 = vunpack.c.l.b16 %v1086
    %v1123 = vunpack.c.l.b16 %v1087
    %v1124 = vunpack.c.l.b16 %v1088
    %v1125 = vunpack.c.l.b16 %v1089
    %v1126 = vunpack.c.l.b16 %v1090
    %v1127 = vunpack.c.l.b16 %v1091
    %v1128 = vunpack.c.l.b16 %v1092
    %v1129 = vunpack.c.l.b16 %v1093
    %v1130 = vunpack.c.l.b16 %v1094
    %v1131 = vunpack.c.l.b16 %v1095
    %v1132 = vunpack.c.l.b16 %v1096
    %v1133 = vunpack.c.l.b16 %v1097
    %v1134 = vpack.c.b16 %v1119, %v1118
    %v1135 = vpack.c.b16 %v1121, %v1120
    %v1136 = vpack.c.b16 %v1123, %v1122
    %v1137 = vpack.c.b16 %v1125, %v1124
    %v1138 = vpack.c.b16 %v1127, %v1126
    %v1139 = vpack.c.b16 %v1129, %v1128
    %v1140 = vpack.c.b16 %v1131, %v1130
    %v1141 = vpack.c.b16 %v1133, %v1132
    %1150 = vmatprep.subr.bf16.mxu0 0
    %1151 = vmatpush1.bf16.msra.mxu0 %v1134
    %1152 = vmatprep.subr.bf16.mxu0 0
    %1153 = vmatpush1.bf16.msra.mxu0 %v1135
    %1154 = vmatprep.subr.bf16.mxu0 0
    %1155 = vmatpush1.bf16.msra.mxu0 %v1136
    %1156 = vmatprep.subr.bf16.mxu0 0
    %1157 = vmatpush1.bf16.msra.mxu0 %v1137
    %1158 = vmatprep.subr.bf16.mxu0 0
    %1159 = vmatpush1.bf16.msra.mxu0 %v1138
    %1160 = vmatprep.subr.bf16.mxu0 0
    %1161 = vmatpush1.bf16.msra.mxu0 %v1139
    %1162 = vmatprep.subr.bf16.mxu0 0
    %1163 = vmatpush1.bf16.msra.mxu0 %v1140
    %1164 = vmatprep.subr.bf16.mxu0 0
    %1165 = vmatpush1.bf16.msra.mxu0 %v1141
    %1166 = vmatprep.subr.bf16.mxu0 0
    %1167 = vmatpush1.bf16.msra.mxu0 0
    %1168 = vmatprep.subr.bf16.mxu0 0
    %1169 = vmatpush1.bf16.msra.mxu0 0
    %1170 = vmatprep.subr.bf16.mxu0 0
    %1171 = vmatpush1.bf16.msra.mxu0 0
    %1172 = vmatprep.subr.bf16.mxu0 0
    %1173 = vmatpush1.bf16.msra.mxu0 0
    %1174 = vmatprep.subr.bf16.mxu0 0
    %1175 = vmatpush1.bf16.msra.mxu0 0
    %1176 = vmatprep.subr.bf16.mxu0 0
    %1177 = vmatpush1.bf16.msra.mxu0 0
    %1178 = vmatprep.subr.bf16.mxu0 0
    %1179 = vmatpush1.bf16.msra.mxu0 0
    %1180 = vmatprep.subr.bf16.mxu0 0
    %1181 = vmatpush1.bf16.msra.mxu0 0
    %1182 = vmatprep.mubr.bf16.mxu0 0
    %1183 = vmatmul.mubr.bf16.gmra.mrb[0].mxu0 %v1081
    %v1184 = vpop.f32.mrb[0].mxu0
    %v1185 = vadd.f32 %v1101, %v1184
    %v1186 = vpop.f32.mrb[0].mxu0
    %v1187 = vpop.f32.mrb[0].mxu0
    %v1188 = vadd.f32 %v1101, %v1187
    %v1189 = vpop.f32.mrb[0].mxu0
    %1190 = vdwg.mxu0
    %v1191 = vadd.f32 %v1010, %v1185
    %v1192 = vadd.f32 %v1011, %v1188
    %v1193 = vsel %vm80, %v1191, 0.0
    %1194 = vadd.xlane.f32.xlu0 %v1193
    %v1195 = vpop.xlane.xlu0 %1194
    %v1196 = vsel %vm80, %v1192, 0.0
    %1197 = vadd.xlane.f32.xlu0 %v1196
    %v1198 = vpop.xlane.xlu0 %1197
    %v1199 = vmul.f32 %v1195, %v979
    %v1200 = vmul.f32 %v1198, %v979
    %v1201 = vsub.f32 %v1191, %v1199
    %v1202 = vsub.f32 %v1192, %v1200
    %v1203 = vmul.f32 %v1201, %v1201
    %v1204 = vmul.f32 %v1202, %v1202
    %v1205 = vsel %vm80, %v1203, 0.0
    %1206 = vadd.xlane.f32.xlu0 %v1205
    %v1207 = vpop.xlane.xlu0 %1206
    %v1208 = vsel %vm80, %v1204, 0.0
    %1209 = vadd.xlane.f32.xlu0 %v1208
    %v1210 = vpop.xlane.xlu0 %1209
    %v1211 = vmul.f32 %v1207, %v979
    %v1212 = vmul.f32 %v1210, %v979
    %v1213 = vadd.f32 %v1211, 1e-05
    %v1214 = vadd.f32 %v1212, 1e-05
    %v1215 = vrsqrt.pop %v1213
    %v1216 = vrsqrt.pop %v1214
    %v1217 = vmul.f32 %v1201, %v1215
    %v1218 = vmul.f32 %v1202, %v1216
    %v1219 = vlaneseq
    %v1220 = vshrl.u32 %v1219, 7
    %v1221 = vsub.s32 0, %v1220
    %v1222 = vrot.slane %v52, %v1221
    %v1223 = vmul.f32 %v1217, %v1222
    %v1224 = vmul.f32 %v1218, %v1222
    %v1225 = vlaneseq
    %v1226 = vshrl.u32 %v1225, 7
    %v1227 = vsub.s32 0, %v1226
    %v1228 = vrot.slane %v53, %v1227
    %v1229 = vadd.f32 %v1223, %v1228
    %v1230 = vadd.f32 %v1224, %v1228
    %1231 = vst.msk [vmem:[#allocation2] sm:$0xff] %vm80, %v1229
    %1232 = vst.msk [vmem:[#allocation2 + $0x8] sm:$0xff] %vm80, %v1230
    // Predicated region
    $region42: #{tpu_custom_call.1} parent=1 // pred_check
      _
    $region43: #{tpu_custom_call.1} parent=1 // pred_check_branch
      %1234 = sbr.rel (0) target = $region45
    $region44: #{tpu_custom_call.1} parent=1 // pred_region
      %s1236 = ssub.s32 256, 256
      %1237 = vsyncadd [#allocation3], %s1236
      %s1238 = sshll.u32 [#allocation2], 4
      %s1239 = int_to_ptr.vmem [resolvable:$true] %s1238
      %1244 = dma.vmem_to_hbm [thread:$0]  %s1239, 256, %s10, [#allocation3], 128, 128, 8
    $region45: #{tpu_custom_call.1} parent=1 // pred_fallthru
      _
    // Predicated region
    $region46: #{tpu_custom_call.1} parent=1 // pred_check
      _
    $region47: #{tpu_custom_call.1} parent=1 // pred_check_branch
      %1246 = sbr.rel (0) target = $region49
    $region48: #{tpu_custom_call.1} parent=1 // pred_region
      %1247 = dma.done [#allocation3], 256
    $region49: #{tpu_custom_call.1} parent=1 // pred_fallthru
      _
    %1248 = vsyncpa [#allocation3], 1

</llo_original>
